<compile_context>
chip_gen: v7x
topology: tpu7x:2x2x1
jax: 0.10.0
libtpu: 0.0.40
codegen_flags: <defaults>
</compile_context>

<pallas_src>
import functools

import jax
import jax.numpy as jnp
from jax.experimental import pallas as pl
from jax.experimental.pallas import tpu as pltpu

EPS = 1e-5
CONV_DTYPE = jnp.bfloat16        # MXU input dtype (accumulation stays fp32)


def _vmem_limit_bytes():
    """Per-generation VMEM budget: ~3/4 of physical, capped at 112 MiB.

    v5e/v6e (128 MiB physical) -> 96 MiB, v7x (64 MiB physical) -> 48 MiB.
    """
    default_cap = 64 * 1024 * 1024
    try:
        cap = getattr(pltpu.get_tpu_info(), "vmem_capacity_bytes", None)
        cap = int(cap) if cap else default_cap
    except Exception:
        cap = default_cap
    return int(min(cap * 3 // 4, 112 * 1024 * 1024))


# ----------------------------- kernels --------------------------------------


def _im2col_3x3(a, H, W):
    """(Cin, H*W) fp32 activation -> (9*Cin, H*W) fp32 zero-padded 3x3 patches.

    Each tap is a static lane shift of the flattened image (jnp.roll lowers to
    XLU lane rotates) plus a static boundary mask, so there are no unaligned
    sub-window writes and no padded scratch copies.  Row r = t*Cin + ci holds
    x[ci, y + oy_t, x + ox_t] (zero outside the image), matching the
    (Cout, 9*Cin) weight layout built in `res_block`.
    """
    HW = a.shape[-1]
    pos = jax.lax.broadcasted_iota(jnp.int32, (1, HW), 1)
    if W & (W - 1) == 0:                      # power-of-two fast path (no vector mod)
        px = jnp.bitwise_and(pos, W - 1)
    else:
        px = pos % W
    taps = []
    for t in range(9):
        oy, ox = t // 3 - 1, t % 3 - 1
        d = oy * W + ox                       # flattened tap offset
        if d == 0:
            taps.append(a)
            continue
        shifted = jnp.roll(a, -d, axis=1)     # shifted[:, p] = a[:, (p + d) % HW]
        valid = ((pos >= -oy * W) & (pos < (H - oy) * W) &
                 (px + ox >= 0) & (px + ox < W))
        taps.append(jnp.where(valid, shifted, 0.0))
    return jnp.concatenate(taps, axis=0)


def conv1_kernel(x_ref, w_ref, y_ref, sum_ref, ssq_ref, *, H, W):
    # x_ref: (1, Cin, HW) f32 | w_ref: (Cout, 9*Cin) bf16
    # y_ref: (1, Cout, HW) bf16 | sum_ref / ssq_ref: (1, Cout, 1) f32
    patch = _im2col_3x3(x_ref[0], H, W).astype(CONV_DTYPE)
    y = jnp.dot(w_ref[...], patch, preferred_element_type=jnp.float32)
    sum_ref[0] = jnp.sum(y, axis=1, keepdims=True)      # BN stats from the fp32
    ssq_ref[0] = jnp.sum(y * y, axis=1, keepdims=True)  # result, before bf16 cast
    y_ref[0] = y.astype(y_ref.dtype)


def bn_relu_conv2_kernel(y1_ref, scale_ref, shift_ref, w_ref,
                         y_ref, sum_ref, ssq_ref, *, H, W):
    # bn1 affine + relu in fp32, then conv2 as a single bf16 im2col matmul.
    a = jnp.maximum(
        y1_ref[0].astype(jnp.float32) * scale_ref[...] + shift_ref[...], 0.0)
    patch = _im2col_3x3(a, H, W).astype(CONV_DTYPE)
    y = jnp.dot(w_ref[...], patch, preferred_element_type=jnp.float32)
    sum_ref[0] = jnp.sum(y, axis=1, keepdims=True)
    ssq_ref[0] = jnp.sum(y * y, axis=1, keepdims=True)
    y_ref[0] = y.astype(y_ref.dtype)


def bn_residual_relu_kernel(y2_ref, x_ref, scale_ref, shift_ref, out_ref):
    out_ref[0] = jnp.maximum(
        y2_ref[0].astype(jnp.float32) * scale_ref[...] + shift_ref[...] + x_ref[0],
        0.0)


# ----------------------------- host wrapper ---------------------------------


def _bn_affine(sums, sqsums, gamma, beta, count):
    """Fold per-image partial sums into the training-mode BN affine (C, 1)."""
    s = jnp.sum(sums, axis=0)[:, 0]           # (C,)
    ss = jnp.sum(sqsums, axis=0)[:, 0]
    mean = s / count
    # TODO(synk): E[x^2]-E[x]^2 can cancel for very large N*H*W; fine at these sizes.
    var = jnp.maximum(ss / count - mean * mean, 0.0)
    scale = gamma * jax.lax.rsqrt(var + EPS)
    shift = beta - mean * scale
    return (scale.reshape(-1, 1).astype(jnp.float32),
            shift.reshape(-1, 1).astype(jnp.float32))


@jax.jit
def res_block(x_nchw, params):
    """Pallas Res_block forward.  x_nchw: (N, C, H, W) f32 -> (N, C, H, W) f32."""
    w1, _b1, g1, be1, w2, _b2, g2, be2 = params      # conv biases cancel under BN
    N, C, H, W = x_nchw.shape
    Cin, Cout = w1.shape[2], w1.shape[3]
    assert Cin == C and Cout == C, (
        "identity residual requires inplanes == planes (stride=1, no downsample)")
    HW = H * W

    # Lane-dense layout: per image the activation lives as (C, H*W); NCHW
    # flattens to this with a pure reshape (no transpose).
    x = x_nchw.reshape(N, C, HW).astype(jnp.float32)
    # HWIO (3,3,Cin,Cout) -> (Cout, 9*Cin), tap-major columns matching _im2col_3x3.
    w1r = jnp.transpose(w1.reshape(9, Cin, Cout), (2, 0, 1)).reshape(Cout, 9 * Cin)
    w2r = jnp.transpose(w2.reshape(9, Cout, Cout), (2, 0, 1)).reshape(Cout, 9 * Cout)
    w1r = w1r.astype(CONV_DTYPE)
    w2r = w2r.astype(CONV_DTYPE)

    cparams = pltpu.CompilerParams(
        dimension_semantics=("parallel",),           # megacore: images across TCs
        vmem_limit_bytes=_vmem_limit_bytes())

    img = lambda i: (i, 0, 0)                        # one image per grid step
    rep = lambda i: (0, 0)                           # broadcast weights / affines

    stat_shape = jax.ShapeDtypeStruct((N, Cout, 1), jnp.float32)
    stat_spec = pl.BlockSpec((1, Cout, 1), img)

    # --- call 1: conv1 -> y1 (bf16) + per-image BN1 partial sums ---------------
    y1, s1, ss1 = pl.pallas_call(
        functools.partial(conv1_kernel, H=H, W=W),
        grid=(N,),
        in_specs=[pl.BlockSpec((1, Cin, HW), img),
                  pl.BlockSpec((Cout, 9 * Cin), rep)],
        out_specs=[pl.BlockSpec((1, Cout, HW), img), stat_spec, stat_spec],
        out_shape=(jax.ShapeDtypeStruct((N, Cout, HW), CONV_DTYPE),
                   stat_shape, stat_shape),
        compiler_params=cparams,
    )(x, w1r)

    scale1, shift1 = _bn_affine(s1, ss1, g1, be1, N * HW)

    # --- call 2: bn1 affine + relu + conv2 -> y2 (bf16, overwrites y1) ---------
    y2, s2, ss2 = pl.pallas_call(
        functools.partial(bn_relu_conv2_kernel, H=H, W=W),
        grid=(N,),
        in_specs=[pl.BlockSpec((1, Cout, HW), img),
                  pl.BlockSpec((Cout, 1), rep),
                  pl.BlockSpec((Cout, 1), rep),
                  pl.BlockSpec((Cout, 9 * Cout), rep)],
        out_specs=[pl.BlockSpec((1, Cout, HW), img), stat_spec, stat_spec],
        out_shape=(jax.ShapeDtypeStruct((N, Cout, HW), CONV_DTYPE),
                   stat_shape, stat_shape),
        input_output_aliases={0: 0},                 # y2 reuses y1's HBM buffer
        compiler_params=cparams,
    )(y1, scale1, shift1, w2r)

    scale2, shift2 = _bn_affine(s2, ss2, g2, be2, N * HW)

    # --- call 3: bn2 affine + residual add + relu (elementwise, fp32 out) ------
    out = pl.pallas_call(
        bn_residual_relu_kernel,
        grid=(N,),
        in_specs=[pl.BlockSpec((1, Cout, HW), img),
                  pl.BlockSpec((1, C, HW), img),
                  pl.BlockSpec((Cout, 1), rep),
                  pl.BlockSpec((Cout, 1), rep)],
        out_specs=pl.BlockSpec((1, Cout, HW), img),
        out_shape=jax.ShapeDtypeStruct((N, Cout, HW), jnp.float32),
        compiler_params=cparams,
    )(y2, x, scale2, shift2)

    return out.reshape(N, C, H, W)


# ----------------------------- references -----------------------------------


def res_block_reference(x_nchw, params, mixed=False):
    """Pure-JAX reference of the PyTorch forward (training-mode BN).

    mixed=True mirrors the kernel numerics exactly: bf16 conv inputs with fp32
    accumulation, bias elided (cancelled by BN), BN statistics from the fp32
    conv output, and a bf16 round-trip of y1 / y2 before the BN affine.
    mixed=False is the exact fp32 PyTorch-equivalent model.
    """
    w1, b1, g1, be1, w2, b2, g2, be2 = params
    cdt = jnp.bfloat16 if mixed else jnp.float32

    def conv(x, w, b):
        y = jax.lax.conv_general_dilated(
            x.astype(cdt), w.astype(cdt), (1, 1), "SAME",
            dimension_numbers=("NCHW", "HWIO", "NCHW"),
            preferred_element_type=jnp.float32)
        if not mixed:
            y = y + b[None, :, None, None]   # bias cancels under BN; kernel omits it
        return y

    def bn_affine(y, g, be):
        m = jnp.mean(y, axis=(0, 2, 3))
        v = jnp.mean(y * y, axis=(0, 2, 3)) - m * m
        scale = g * jax.lax.rsqrt(v + EPS)
        shift = be - m * scale
        return scale[None, :, None, None], shift[None, :, None, None]

    def round_trip(y):
        return y.astype(jnp.bfloat16).astype(jnp.float32) if mixed else y

    y1 = conv(x_nchw, w1, b1)
    sc1, sh1 = bn_affine(y1, g1, be1)
    a1 = jnp.maximum(round_trip(y1) * sc1 + sh1, 0.0)
    y2 = conv(a1, w2, b2)
    sc2, sh2 = bn_affine(y2, g2, be2)
    return jnp.maximum(round_trip(y2) * sc2 + sh2 + x_nchw, 0.0)


def init_params(key, inplanes, planes):
    """Deterministic synthetic parameters (PyTorch __init__ shapes, HWIO weights)."""
    ks = jax.random.split(key, 8)
    w1 = 0.1 * jax.random.normal(ks[0], (3, 3, inplanes, planes), jnp.float32)
    b1 = 0.05 * jax.random.normal(ks[1], (planes,), jnp.float32)
    g1 = 1.0 + 0.1 * jax.random.normal(ks[2], (planes,), jnp.float32)
    be1 = 0.05 * jax.random.normal(ks[3], (planes,), jnp.float32)
    w2 = 0.1 * jax.random.normal(ks[4], (3, 3, planes, planes), jnp.float32)
    b2 = 0.05 * jax.random.normal(ks[5], (planes,), jnp.float32)
    g2 = 1.0 + 0.1 * jax.random.normal(ks[6], (planes,), jnp.float32)
    be2 = 0.05 * jax.random.normal(ks[7], (planes,), jnp.float32)
    return (w1, b1, g1, be1, w2, b2, g2, be2)


if __name__ == "__main__":
    key = jax.random.PRNGKey(0)
    k_x, k_p = jax.random.split(key)

    N, C, H, W = 2, 4, 16, 16        # inplanes = planes = 4 (stride=1, no downsample)
    x = jax.random.normal(k_x, (N, C, H, W), jnp.float32)
    params = init_params(k_p, C, C)

    out = jax.block_until_ready(res_block(x, params))
    assert out.shape == (N, C, H, W)

    # Tight check against a reference that mirrors the kernel numerics exactly
    # (bf16 matmul inputs, fp32 accumulation/statistics, bf16 intermediates).
    ref_mixed = res_block_reference(x, params, mixed=True)
    err_mixed = float(jnp.max(jnp.abs(out - ref_mixed)))
    assert jnp.allclose(out, ref_mixed, rtol=1e-2, atol=1e-2), (
        f"mixed-precision reference mismatch: max abs err = {err_mixed}")

    # Loose sanity bound against the exact fp32 PyTorch-equivalent forward
    # (accounts only for bf16 rounding in the two convs / intermediates).
    ref_f32 = res_block_reference(x, params, mixed=False)
    err_f32 = float(jnp.max(jnp.abs(out - ref_f32)))
    assert err_f32 < 0.5, f"fp32 reference sanity check failed: max abs err = {err_f32}"

    print("KERNEL_OK")
</pallas_src>

<mosaic_0001>
module attributes {stable_mosaic.version = 11 : i64} {
  func.func @conv1_kernel(%arg0: i32, %arg1: memref<1x4x256xf32, #tpu.memory_space<vmem>>, %arg2: memref<4x36xbf16, #tpu.memory_space<vmem>>, %arg3: memref<1x4x256xbf16, #tpu.memory_space<vmem>>, %arg4: memref<1x4x1xf32, #tpu.memory_space<vmem>>, %arg5: memref<1x4x1xf32, #tpu.memory_space<vmem>>) attributes {dimension_semantics = [#tpu.dimension_semantics<parallel>], iteration_bounds = array<i64: 2>, scalar_prefetch = 0 : i64, scratch_operands = 0 : i64, tpu.core_type = #tpu.core_type<tc>, window_params = [{transform_indices = @transform_0, window_bounds = array<i64: 1, 4, 256>}, {pipeline_mode = #tpu.pipeline_mode<synchronous>, transform_indices = @transform_1, window_bounds = array<i64: 4, 36>}, {transform_indices = @transform_2, window_bounds = array<i64: 1, 4, 256>}, {transform_indices = @transform_3, window_bounds = array<i64: 1, 4, 1>}, {transform_indices = @transform_4, window_bounds = array<i64: 1, 4, 1>}]} {
    %c0 = arith.constant 0 : index
    %c0_0 = arith.constant 0 : index
    %c0_1 = arith.constant 0 : index
    %0 = vector.load %arg1[%c0, %c0_0, %c0_1] : memref<1x4x256xf32, #tpu.memory_space<vmem>>, vector<1x4x256xf32>
    %1 = vector.shape_cast %0 : vector<1x4x256xf32> to vector<4x256xf32>
    %2 = tpu.iota {dimensions = array<i32: 1>} : vector<1x256xi32>
    %c15_i32 = arith.constant 15 : i32
    %3 = vector.broadcast %c15_i32 : i32 to vector<1x256xi32>
    %4 = arith.andi %2, %3 : vector<1x256xi32>
    %5 = vector.extract_strided_slice %1 {offsets = [0, 239], sizes = [4, 17], strides = [1, 1]} : vector<4x256xf32> to vector<4x17xf32>
    %6 = vector.extract_strided_slice %1 {offsets = [0, 0], sizes = [4, 239], strides = [1, 1]} : vector<4x256xf32> to vector<4x239xf32>
    %7 = tpu.concatenate %5, %6 in 1 : vector<4x17xf32>, vector<4x239xf32> -> vector<4x256xf32>
    %c16_i32 = arith.constant 16 : i32
    %8 = vector.broadcast %c16_i32 : i32 to vector<1x256xi32>
    %9 = arith.cmpi sge, %2, %8 : vector<1x256xi32>
    %c272_i32 = arith.constant 272 : i32
    %10 = vector.broadcast %c272_i32 : i32 to vector<1x256xi32>
    %11 = arith.cmpi slt, %2, %10 : vector<1x256xi32>
    %12 = arith.andi %9, %11 : vector<1x256xi1>
    %c-1_i32 = arith.constant -1 : i32
    %13 = vector.broadcast %c-1_i32 : i32 to vector<1x256xi32>
    %14 = arith.addi %4, %13 : vector<1x256xi32>
    %c0_i32 = arith.constant 0 : i32
    %15 = vector.broadcast %c0_i32 : i32 to vector<1x256xi32>
    %16 = arith.cmpi sge, %14, %15 : vector<1x256xi32>
    %17 = arith.andi %12, %16 : vector<1x256xi1>
    %c-1_i32_2 = arith.constant -1 : i32
    %18 = vector.broadcast %c-1_i32_2 : i32 to vector<1x256xi32>
    %19 = arith.addi %4, %18 : vector<1x256xi32>
    %c16_i32_3 = arith.constant 16 : i32
    %20 = vector.broadcast %c16_i32_3 : i32 to vector<1x256xi32>
    %21 = arith.cmpi slt, %19, %20 : vector<1x256xi32>
    %22 = arith.andi %17, %21 : vector<1x256xi1>
    %cst = arith.constant 0.000000e+00 : f32
    %23 = vector.shape_cast %22 : vector<1x256xi1> to vector<1x256xi1>
    %24 = vector.broadcast %23 : vector<1x256xi1> to vector<4x256xi1>
    %25 = vector.broadcast %cst : f32 to vector<4x256xf32>
    %26 = arith.select %24, %7, %25 : vector<4x256xi1>, vector<4x256xf32>
    %27 = vector.extract_strided_slice %1 {offsets = [0, 240], sizes = [4, 16], strides = [1, 1]} : vector<4x256xf32> to vector<4x16xf32>
    %28 = vector.extract_strided_slice %1 {offsets = [0, 0], sizes = [4, 240], strides = [1, 1]} : vector<4x256xf32> to vector<4x240xf32>
    %29 = tpu.concatenate %27, %28 in 1 : vector<4x16xf32>, vector<4x240xf32> -> vector<4x256xf32>
    %c16_i32_4 = arith.constant 16 : i32
    %30 = vector.broadcast %c16_i32_4 : i32 to vector<1x256xi32>
    %31 = arith.cmpi sge, %2, %30 : vector<1x256xi32>
    %c272_i32_5 = arith.constant 272 : i32
    %32 = vector.broadcast %c272_i32_5 : i32 to vector<1x256xi32>
    %33 = arith.cmpi slt, %2, %32 : vector<1x256xi32>
    %34 = arith.andi %31, %33 : vector<1x256xi1>
    %c0_i32_6 = arith.constant 0 : i32
    %35 = vector.broadcast %c0_i32_6 : i32 to vector<1x256xi32>
    %36 = arith.addi %4, %35 : vector<1x256xi32>
    %c0_i32_7 = arith.constant 0 : i32
    %37 = vector.broadcast %c0_i32_7 : i32 to vector<1x256xi32>
    %38 = arith.cmpi sge, %36, %37 : vector<1x256xi32>
    %39 = arith.andi %34, %38 : vector<1x256xi1>
    %c0_i32_8 = arith.constant 0 : i32
    %40 = vector.broadcast %c0_i32_8 : i32 to vector<1x256xi32>
    %41 = arith.addi %4, %40 : vector<1x256xi32>
    %c16_i32_9 = arith.constant 16 : i32
    %42 = vector.broadcast %c16_i32_9 : i32 to vector<1x256xi32>
    %43 = arith.cmpi slt, %41, %42 : vector<1x256xi32>
    %44 = arith.andi %39, %43 : vector<1x256xi1>
    %cst_10 = arith.constant 0.000000e+00 : f32
    %45 = vector.shape_cast %44 : vector<1x256xi1> to vector<1x256xi1>
    %46 = vector.broadcast %45 : vector<1x256xi1> to vector<4x256xi1>
    %47 = vector.broadcast %cst_10 : f32 to vector<4x256xf32>
    %48 = arith.select %46, %29, %47 : vector<4x256xi1>, vector<4x256xf32>
    %49 = vector.extract_strided_slice %1 {offsets = [0, 241], sizes = [4, 15], strides = [1, 1]} : vector<4x256xf32> to vector<4x15xf32>
    %50 = vector.extract_strided_slice %1 {offsets = [0, 0], sizes = [4, 241], strides = [1, 1]} : vector<4x256xf32> to vector<4x241xf32>
    %51 = tpu.concatenate %49, %50 in 1 : vector<4x15xf32>, vector<4x241xf32> -> vector<4x256xf32>
    %c16_i32_11 = arith.constant 16 : i32
    %52 = vector.broadcast %c16_i32_11 : i32 to vector<1x256xi32>
    %53 = arith.cmpi sge, %2, %52 : vector<1x256xi32>
    %c272_i32_12 = arith.constant 272 : i32
    %54 = vector.broadcast %c272_i32_12 : i32 to vector<1x256xi32>
    %55 = arith.cmpi slt, %2, %54 : vector<1x256xi32>
    %56 = arith.andi %53, %55 : vector<1x256xi1>
    %c1_i32 = arith.constant 1 : i32
    %57 = vector.broadcast %c1_i32 : i32 to vector<1x256xi32>
    %58 = arith.addi %4, %57 : vector<1x256xi32>
    %c0_i32_13 = arith.constant 0 : i32
    %59 = vector.broadcast %c0_i32_13 : i32 to vector<1x256xi32>
    %60 = arith.cmpi sge, %58, %59 : vector<1x256xi32>
    %61 = arith.andi %56, %60 : vector<1x256xi1>
    %c1_i32_14 = arith.constant 1 : i32
    %62 = vector.broadcast %c1_i32_14 : i32 to vector<1x256xi32>
    %63 = arith.addi %4, %62 : vector<1x256xi32>
    %c16_i32_15 = arith.constant 16 : i32
    %64 = vector.broadcast %c16_i32_15 : i32 to vector<1x256xi32>
    %65 = arith.cmpi slt, %63, %64 : vector<1x256xi32>
    %66 = arith.andi %61, %65 : vector<1x256xi1>
    %cst_16 = arith.constant 0.000000e+00 : f32
    %67 = vector.shape_cast %66 : vector<1x256xi1> to vector<1x256xi1>
    %68 = vector.broadcast %67 : vector<1x256xi1> to vector<4x256xi1>
    %69 = vector.broadcast %cst_16 : f32 to vector<4x256xf32>
    %70 = arith.select %68, %51, %69 : vector<4x256xi1>, vector<4x256xf32>
    %71 = vector.extract_strided_slice %1 {offsets = [0, 255], sizes = [4, 1], strides = [1, 1]} : vector<4x256xf32> to vector<4x1xf32>
    %72 = vector.extract_strided_slice %1 {offsets = [0, 0], sizes = [4, 255], strides = [1, 1]} : vector<4x256xf32> to vector<4x255xf32>
    %73 = tpu.concatenate %71, %72 in 1 : vector<4x1xf32>, vector<4x255xf32> -> vector<4x256xf32>
    %c0_i32_17 = arith.constant 0 : i32
    %74 = vector.broadcast %c0_i32_17 : i32 to vector<1x256xi32>
    %75 = arith.cmpi sge, %2, %74 : vector<1x256xi32>
    %c256_i32 = arith.constant 256 : i32
    %76 = vector.broadcast %c256_i32 : i32 to vector<1x256xi32>
    %77 = arith.cmpi slt, %2, %76 : vector<1x256xi32>
    %78 = arith.andi %75, %77 : vector<1x256xi1>
    %c-1_i32_18 = arith.constant -1 : i32
    %79 = vector.broadcast %c-1_i32_18 : i32 to vector<1x256xi32>
    %80 = arith.addi %4, %79 : vector<1x256xi32>
    %c0_i32_19 = arith.constant 0 : i32
    %81 = vector.broadcast %c0_i32_19 : i32 to vector<1x256xi32>
    %82 = arith.cmpi sge, %80, %81 : vector<1x256xi32>
    %83 = arith.andi %78, %82 : vector<1x256xi1>
    %c-1_i32_20 = arith.constant -1 : i32
    %84 = vector.broadcast %c-1_i32_20 : i32 to vector<1x256xi32>
    %85 = arith.addi %4, %84 : vector<1x256xi32>
    %c16_i32_21 = arith.constant 16 : i32
    %86 = vector.broadcast %c16_i32_21 : i32 to vector<1x256xi32>
    %87 = arith.cmpi slt, %85, %86 : vector<1x256xi32>
    %88 = arith.andi %83, %87 : vector<1x256xi1>
    %cst_22 = arith.constant 0.000000e+00 : f32
    %89 = vector.shape_cast %88 : vector<1x256xi1> to vector<1x256xi1>
    %90 = vector.broadcast %89 : vector<1x256xi1> to vector<4x256xi1>
    %91 = vector.broadcast %cst_22 : f32 to vector<4x256xf32>
    %92 = arith.select %90, %73, %91 : vector<4x256xi1>, vector<4x256xf32>
    %93 = vector.extract_strided_slice %1 {offsets = [0, 1], sizes = [4, 255], strides = [1, 1]} : vector<4x256xf32> to vector<4x255xf32>
    %94 = vector.extract_strided_slice %1 {offsets = [0, 0], sizes = [4, 1], strides = [1, 1]} : vector<4x256xf32> to vector<4x1xf32>
    %95 = tpu.concatenate %93, %94 in 1 : vector<4x255xf32>, vector<4x1xf32> -> vector<4x256xf32>
    %c0_i32_23 = arith.constant 0 : i32
    %96 = vector.broadcast %c0_i32_23 : i32 to vector<1x256xi32>
    %97 = arith.cmpi sge, %2, %96 : vector<1x256xi32>
    %c256_i32_24 = arith.constant 256 : i32
    %98 = vector.broadcast %c256_i32_24 : i32 to vector<1x256xi32>
    %99 = arith.cmpi slt, %2, %98 : vector<1x256xi32>
    %100 = arith.andi %97, %99 : vector<1x256xi1>
    %c1_i32_25 = arith.constant 1 : i32
    %101 = vector.broadcast %c1_i32_25 : i32 to vector<1x256xi32>
    %102 = arith.addi %4, %101 : vector<1x256xi32>
    %c0_i32_26 = arith.constant 0 : i32
    %103 = vector.broadcast %c0_i32_26 : i32 to vector<1x256xi32>
    %104 = arith.cmpi sge, %102, %103 : vector<1x256xi32>
    %105 = arith.andi %100, %104 : vector<1x256xi1>
    %c1_i32_27 = arith.constant 1 : i32
    %106 = vector.broadcast %c1_i32_27 : i32 to vector<1x256xi32>
    %107 = arith.addi %4, %106 : vector<1x256xi32>
    %c16_i32_28 = arith.constant 16 : i32
    %108 = vector.broadcast %c16_i32_28 : i32 to vector<1x256xi32>
    %109 = arith.cmpi slt, %107, %108 : vector<1x256xi32>
    %110 = arith.andi %105, %109 : vector<1x256xi1>
    %cst_29 = arith.constant 0.000000e+00 : f32
    %111 = vector.shape_cast %110 : vector<1x256xi1> to vector<1x256xi1>
    %112 = vector.broadcast %111 : vector<1x256xi1> to vector<4x256xi1>
    %113 = vector.broadcast %cst_29 : f32 to vector<4x256xf32>
    %114 = arith.select %112, %95, %113 : vector<4x256xi1>, vector<4x256xf32>
    %115 = vector.extract_strided_slice %1 {offsets = [0, 15], sizes = [4, 241], strides = [1, 1]} : vector<4x256xf32> to vector<4x241xf32>
    %116 = vector.extract_strided_slice %1 {offsets = [0, 0], sizes = [4, 15], strides = [1, 1]} : vector<4x256xf32> to vector<4x15xf32>
    %117 = tpu.concatenate %115, %116 in 1 : vector<4x241xf32>, vector<4x15xf32> -> vector<4x256xf32>
    %c-16_i32 = arith.constant -16 : i32
    %118 = vector.broadcast %c-16_i32 : i32 to vector<1x256xi32>
    %119 = arith.cmpi sge, %2, %118 : vector<1x256xi32>
    %c240_i32 = arith.constant 240 : i32
    %120 = vector.broadcast %c240_i32 : i32 to vector<1x256xi32>
    %121 = arith.cmpi slt, %2, %120 : vector<1x256xi32>
    %122 = arith.andi %119, %121 : vector<1x256xi1>
    %c-1_i32_30 = arith.constant -1 : i32
    %123 = vector.broadcast %c-1_i32_30 : i32 to vector<1x256xi32>
    %124 = arith.addi %4, %123 : vector<1x256xi32>
    %c0_i32_31 = arith.constant 0 : i32
    %125 = vector.broadcast %c0_i32_31 : i32 to vector<1x256xi32>
    %126 = arith.cmpi sge, %124, %125 : vector<1x256xi32>
    %127 = arith.andi %122, %126 : vector<1x256xi1>
    %c-1_i32_32 = arith.constant -1 : i32
    %128 = vector.broadcast %c-1_i32_32 : i32 to vector<1x256xi32>
    %129 = arith.addi %4, %128 : vector<1x256xi32>
    %c16_i32_33 = arith.constant 16 : i32
    %130 = vector.broadcast %c16_i32_33 : i32 to vector<1x256xi32>
    %131 = arith.cmpi slt, %129, %130 : vector<1x256xi32>
    %132 = arith.andi %127, %131 : vector<1x256xi1>
    %cst_34 = arith.constant 0.000000e+00 : f32
    %133 = vector.shape_cast %132 : vector<1x256xi1> to vector<1x256xi1>
    %134 = vector.broadcast %133 : vector<1x256xi1> to vector<4x256xi1>
    %135 = vector.broadcast %cst_34 : f32 to vector<4x256xf32>
    %136 = arith.select %134, %117, %135 : vector<4x256xi1>, vector<4x256xf32>
    %137 = vector.extract_strided_slice %1 {offsets = [0, 16], sizes = [4, 240], strides = [1, 1]} : vector<4x256xf32> to vector<4x240xf32>
    %138 = vector.extract_strided_slice %1 {offsets = [0, 0], sizes = [4, 16], strides = [1, 1]} : vector<4x256xf32> to vector<4x16xf32>
    %139 = tpu.concatenate %137, %138 in 1 : vector<4x240xf32>, vector<4x16xf32> -> vector<4x256xf32>
    %c-16_i32_35 = arith.constant -16 : i32
    %140 = vector.broadcast %c-16_i32_35 : i32 to vector<1x256xi32>
    %141 = arith.cmpi sge, %2, %140 : vector<1x256xi32>
    %c240_i32_36 = arith.constant 240 : i32
    %142 = vector.broadcast %c240_i32_36 : i32 to vector<1x256xi32>
    %143 = arith.cmpi slt, %2, %142 : vector<1x256xi32>
    %144 = arith.andi %141, %143 : vector<1x256xi1>
    %c0_i32_37 = arith.constant 0 : i32
    %145 = vector.broadcast %c0_i32_37 : i32 to vector<1x256xi32>
    %146 = arith.addi %4, %145 : vector<1x256xi32>
    %c0_i32_38 = arith.constant 0 : i32
    %147 = vector.broadcast %c0_i32_38 : i32 to vector<1x256xi32>
    %148 = arith.cmpi sge, %146, %147 : vector<1x256xi32>
    %149 = arith.andi %144, %148 : vector<1x256xi1>
    %c0_i32_39 = arith.constant 0 : i32
    %150 = vector.broadcast %c0_i32_39 : i32 to vector<1x256xi32>
    %151 = arith.addi %4, %150 : vector<1x256xi32>
    %c16_i32_40 = arith.constant 16 : i32
    %152 = vector.broadcast %c16_i32_40 : i32 to vector<1x256xi32>
    %153 = arith.cmpi slt, %151, %152 : vector<1x256xi32>
    %154 = arith.andi %149, %153 : vector<1x256xi1>
    %cst_41 = arith.constant 0.000000e+00 : f32
    %155 = vector.shape_cast %154 : vector<1x256xi1> to vector<1x256xi1>
    %156 = vector.broadcast %155 : vector<1x256xi1> to vector<4x256xi1>
    %157 = vector.broadcast %cst_41 : f32 to vector<4x256xf32>
    %158 = arith.select %156, %139, %157 : vector<4x256xi1>, vector<4x256xf32>
    %159 = vector.extract_strided_slice %1 {offsets = [0, 17], sizes = [4, 239], strides = [1, 1]} : vector<4x256xf32> to vector<4x239xf32>
    %160 = vector.extract_strided_slice %1 {offsets = [0, 0], sizes = [4, 17], strides = [1, 1]} : vector<4x256xf32> to vector<4x17xf32>
    %161 = tpu.concatenate %159, %160 in 1 : vector<4x239xf32>, vector<4x17xf32> -> vector<4x256xf32>
    %c-16_i32_42 = arith.constant -16 : i32
    %162 = vector.broadcast %c-16_i32_42 : i32 to vector<1x256xi32>
    %163 = arith.cmpi sge, %2, %162 : vector<1x256xi32>
    %c240_i32_43 = arith.constant 240 : i32
    %164 = vector.broadcast %c240_i32_43 : i32 to vector<1x256xi32>
    %165 = arith.cmpi slt, %2, %164 : vector<1x256xi32>
    %166 = arith.andi %163, %165 : vector<1x256xi1>
    %c1_i32_44 = arith.constant 1 : i32
    %167 = vector.broadcast %c1_i32_44 : i32 to vector<1x256xi32>
    %168 = arith.addi %4, %167 : vector<1x256xi32>
    %c0_i32_45 = arith.constant 0 : i32
    %169 = vector.broadcast %c0_i32_45 : i32 to vector<1x256xi32>
    %170 = arith.cmpi sge, %168, %169 : vector<1x256xi32>
    %171 = arith.andi %166, %170 : vector<1x256xi1>
    %c1_i32_46 = arith.constant 1 : i32
    %172 = vector.broadcast %c1_i32_46 : i32 to vector<1x256xi32>
    %173 = arith.addi %4, %172 : vector<1x256xi32>
    %c16_i32_47 = arith.constant 16 : i32
    %174 = vector.broadcast %c16_i32_47 : i32 to vector<1x256xi32>
    %175 = arith.cmpi slt, %173, %174 : vector<1x256xi32>
    %176 = arith.andi %171, %175 : vector<1x256xi1>
    %cst_48 = arith.constant 0.000000e+00 : f32
    %177 = vector.shape_cast %176 : vector<1x256xi1> to vector<1x256xi1>
    %178 = vector.broadcast %177 : vector<1x256xi1> to vector<4x256xi1>
    %179 = vector.broadcast %cst_48 : f32 to vector<4x256xf32>
    %180 = arith.select %178, %161, %179 : vector<4x256xi1>, vector<4x256xf32>
    %181 = tpu.concatenate %26, %48, %70, %92, %1, %114, %136, %158, %180 in 0 : vector<4x256xf32>, vector<4x256xf32>, vector<4x256xf32>, vector<4x256xf32>, vector<4x256xf32>, vector<4x256xf32>, vector<4x256xf32>, vector<4x256xf32>, vector<4x256xf32> -> vector<36x256xf32>
    %182 = arith.truncf %181 : vector<36x256xf32> to vector<36x256xbf16>
    %c0_49 = arith.constant 0 : index
    %c0_50 = arith.constant 0 : index
    %183 = vector.load %arg2[%c0_49, %c0_50] : memref<4x36xbf16, #tpu.memory_space<vmem>>, vector<4x36xbf16>
    %cst_51 = arith.constant dense<0.000000e+00> : vector<4x256xf32>
    %184 = tpu.matmul %183, %182, %cst_51 {dimension_numbers = #tpu.dot_dimension_numbers<[1], [0], [0], [1], [0, 0, 1, 1], [], []>} : vector<4x36xbf16>, vector<36x256xbf16>, vector<4x256xf32> -> vector<4x256xf32>
    %cst_52 = arith.constant dense<0.000000e+00> : vector<4xf32>
    %185 = vector.multi_reduction <add>, %184, %cst_52 [1] : vector<4x256xf32> to vector<4xf32>
    %186 = vector.shape_cast %185 : vector<4xf32> to vector<4x1xf32>
    %c0_53 = arith.constant 0 : index
    %c0_54 = arith.constant 0 : index
    %c0_55 = arith.constant 0 : index
    %187 = vector.load %arg4[%c0_53, %c0_54, %c0_55] : memref<1x4x1xf32, #tpu.memory_space<vmem>>, vector<1x4x1xf32>
    %188 = vector.shape_cast %187 : vector<1x4x1xf32> to vector<4x1xf32>
    %189 = vector.shape_cast %186 : vector<4x1xf32> to vector<1x4x1xf32>
    tpu.vector_store %arg4[%c0_53, %c0_54, %c0_55], %189 {strides = array<i32>} : memref<1x4x1xf32, #tpu.memory_space<vmem>>, vector<1x4x1xf32>,
    %190 = arith.mulf %184, %184 : vector<4x256xf32>
    %cst_56 = arith.constant dense<0.000000e+00> : vector<4xf32>
    %191 = vector.multi_reduction <add>, %190, %cst_56 [1] : vector<4x256xf32> to vector<4xf32>
    %192 = vector.shape_cast %191 : vector<4xf32> to vector<4x1xf32>
    %c0_57 = arith.constant 0 : index
    %c0_58 = arith.constant 0 : index
    %c0_59 = arith.constant 0 : index
    %193 = vector.load %arg5[%c0_57, %c0_58, %c0_59] : memref<1x4x1xf32, #tpu.memory_space<vmem>>, vector<1x4x1xf32>
    %194 = vector.shape_cast %193 : vector<1x4x1xf32> to vector<4x1xf32>
    %195 = vector.shape_cast %192 : vector<4x1xf32> to vector<1x4x1xf32>
    tpu.vector_store %arg5[%c0_57, %c0_58, %c0_59], %195 {strides = array<i32>} : memref<1x4x1xf32, #tpu.memory_space<vmem>>, vector<1x4x1xf32>,
    %196 = arith.truncf %184 : vector<4x256xf32> to vector<4x256xbf16>
    %c0_60 = arith.constant 0 : index
    %c0_61 = arith.constant 0 : index
    %c0_62 = arith.constant 0 : index
    %197 = vector.load %arg3[%c0_60, %c0_61, %c0_62] : memref<1x4x256xbf16, #tpu.memory_space<vmem>>, vector<1x4x256xbf16>
    %198 = vector.shape_cast %197 : vector<1x4x256xbf16> to vector<4x256xbf16>
    %199 = vector.shape_cast %196 : vector<4x256xbf16> to vector<1x4x256xbf16>
    tpu.vector_store %arg3[%c0_60, %c0_61, %c0_62], %199 {strides = array<i32>} : memref<1x4x256xbf16, #tpu.memory_space<vmem>>, vector<1x4x256xbf16>,
    return
  }
  func.func @transform_0(%arg0: i32) -> (i32, i32, i32) {
    %c0_i32 = arith.constant 0 : i32
    %c0_i32_0 = arith.constant 0 : i32
    %c0_i32_1 = arith.constant 0 : i32
    return %arg0, %c0_i32, %c0_i32_0 : i32, i32, i32
  }
  func.func @transform_1(%arg0: i32) -> (i32, i32) {
    %c0_i32 = arith.constant 0 : i32
    %c0_i32_0 = arith.constant 0 : i32
    %c0_i32_1 = arith.constant 0 : i32
    return %c0_i32, %c0_i32_0 : i32, i32
  }
  func.func @transform_2(%arg0: i32) -> (i32, i32, i32) {
    %c0_i32 = arith.constant 0 : i32
    %c0_i32_0 = arith.constant 0 : i32
    %c0_i32_1 = arith.constant 0 : i32
    return %arg0, %c0_i32, %c0_i32_0 : i32, i32, i32
  }
  func.func @transform_3(%arg0: i32) -> (i32, i32, i32) {
    %c0_i32 = arith.constant 0 : i32
    %c0_i32_0 = arith.constant 0 : i32
    %c0_i32_1 = arith.constant 0 : i32
    return %arg0, %c0_i32, %c0_i32_0 : i32, i32, i32
  }
  func.func @transform_4(%arg0: i32) -> (i32, i32, i32) {
    %c0_i32 = arith.constant 0 : i32
    %c0_i32_0 = arith.constant 0 : i32
    %c0_i32_1 = arith.constant 0 : i32
    return %arg0, %c0_i32, %c0_i32_0 : i32, i32, i32
  }
}

module attributes {stable_mosaic.version = 11 : i64} {
  func.func @bn_relu_conv2_kernel(%arg0: i32, %arg1: memref<1x4x256xbf16, #tpu.memory_space<vmem>>, %arg2: memref<4x1xf32, #tpu.memory_space<vmem>>, %arg3: memref<4x1xf32, #tpu.memory_space<vmem>>, %arg4: memref<4x36xbf16, #tpu.memory_space<vmem>>, %arg5: memref<1x4x256xbf16, #tpu.memory_space<vmem>>, %arg6: memref<1x4x1xf32, #tpu.memory_space<vmem>>, %arg7: memref<1x4x1xf32, #tpu.memory_space<vmem>>) attributes {dimension_semantics = [#tpu.dimension_semantics<parallel>], iteration_bounds = array<i64: 2>, scalar_prefetch = 0 : i64, scratch_operands = 0 : i64, tpu.core_type = #tpu.core_type<tc>, window_params = [{transform_indices = @transform_0, window_bounds = array<i64: 1, 4, 256>}, {pipeline_mode = #tpu.pipeline_mode<synchronous>, transform_indices = @transform_1, window_bounds = array<i64: 4, 1>}, {pipeline_mode = #tpu.pipeline_mode<synchronous>, transform_indices = @transform_2, window_bounds = array<i64: 4, 1>}, {pipeline_mode = #tpu.pipeline_mode<synchronous>, transform_indices = @transform_3, window_bounds = array<i64: 4, 36>}, {transform_indices = @transform_4, window_bounds = array<i64: 1, 4, 256>}, {transform_indices = @transform_5, window_bounds = array<i64: 1, 4, 1>}, {transform_indices = @transform_6, window_bounds = array<i64: 1, 4, 1>}]} {
    %c0 = arith.constant 0 : index
    %c0_0 = arith.constant 0 : index
    %c0_1 = arith.constant 0 : index
    %0 = vector.load %arg1[%c0, %c0_0, %c0_1] : memref<1x4x256xbf16, #tpu.memory_space<vmem>>, vector<1x4x256xbf16>
    %1 = vector.shape_cast %0 : vector<1x4x256xbf16> to vector<4x256xbf16>
    %2 = arith.extf %1 : vector<4x256xbf16> to vector<4x256xf32>
    %c0_2 = arith.constant 0 : index
    %c0_3 = arith.constant 0 : index
    %3 = vector.load %arg2[%c0_2, %c0_3] : memref<4x1xf32, #tpu.memory_space<vmem>>, vector<4x1xf32>
    %4 = vector.broadcast %3 : vector<4x1xf32> to vector<4x256xf32>
    %5 = arith.mulf %2, %4 : vector<4x256xf32>
    %c0_4 = arith.constant 0 : index
    %c0_5 = arith.constant 0 : index
    %6 = vector.load %arg3[%c0_4, %c0_5] : memref<4x1xf32, #tpu.memory_space<vmem>>, vector<4x1xf32>
    %7 = vector.broadcast %6 : vector<4x1xf32> to vector<4x256xf32>
    %8 = arith.addf %5, %7 : vector<4x256xf32>
    %cst = arith.constant 0.000000e+00 : f32
    %9 = vector.broadcast %cst : f32 to vector<4x256xf32>
    %10 = arith.maximumf %8, %9 : vector<4x256xf32>
    %11 = tpu.iota {dimensions = array<i32: 1>} : vector<1x256xi32>
    %c15_i32 = arith.constant 15 : i32
    %12 = vector.broadcast %c15_i32 : i32 to vector<1x256xi32>
    %13 = arith.andi %11, %12 : vector<1x256xi32>
    %14 = vector.extract_strided_slice %10 {offsets = [0, 239], sizes = [4, 17], strides = [1, 1]} : vector<4x256xf32> to vector<4x17xf32>
    %15 = vector.extract_strided_slice %10 {offsets = [0, 0], sizes = [4, 239], strides = [1, 1]} : vector<4x256xf32> to vector<4x239xf32>
    %16 = tpu.concatenate %14, %15 in 1 : vector<4x17xf32>, vector<4x239xf32> -> vector<4x256xf32>
    %c16_i32 = arith.constant 16 : i32
    %17 = vector.broadcast %c16_i32 : i32 to vector<1x256xi32>
    %18 = arith.cmpi sge, %11, %17 : vector<1x256xi32>
    %c272_i32 = arith.constant 272 : i32
    %19 = vector.broadcast %c272_i32 : i32 to vector<1x256xi32>
    %20 = arith.cmpi slt, %11, %19 : vector<1x256xi32>
    %21 = arith.andi %18, %20 : vector<1x256xi1>
    %c-1_i32 = arith.constant -1 : i32
    %22 = vector.broadcast %c-1_i32 : i32 to vector<1x256xi32>
    %23 = arith.addi %13, %22 : vector<1x256xi32>
    %c0_i32 = arith.constant 0 : i32
    %24 = vector.broadcast %c0_i32 : i32 to vector<1x256xi32>
    %25 = arith.cmpi sge, %23, %24 : vector<1x256xi32>
    %26 = arith.andi %21, %25 : vector<1x256xi1>
    %c-1_i32_6 = arith.constant -1 : i32
    %27 = vector.broadcast %c-1_i32_6 : i32 to vector<1x256xi32>
    %28 = arith.addi %13, %27 : vector<1x256xi32>
    %c16_i32_7 = arith.constant 16 : i32
    %29 = vector.broadcast %c16_i32_7 : i32 to vector<1x256xi32>
    %30 = arith.cmpi slt, %28, %29 : vector<1x256xi32>
    %31 = arith.andi %26, %30 : vector<1x256xi1>
    %cst_8 = arith.constant 0.000000e+00 : f32
    %32 = vector.shape_cast %31 : vector<1x256xi1> to vector<1x256xi1>
    %33 = vector.broadcast %32 : vector<1x256xi1> to vector<4x256xi1>
    %34 = vector.broadcast %cst_8 : f32 to vector<4x256xf32>
    %35 = arith.select %33, %16, %34 : vector<4x256xi1>, vector<4x256xf32>
    %36 = vector.extract_strided_slice %10 {offsets = [0, 240], sizes = [4, 16], strides = [1, 1]} : vector<4x256xf32> to vector<4x16xf32>
    %37 = vector.extract_strided_slice %10 {offsets = [0, 0], sizes = [4, 240], strides = [1, 1]} : vector<4x256xf32> to vector<4x240xf32>
    %38 = tpu.concatenate %36, %37 in 1 : vector<4x16xf32>, vector<4x240xf32> -> vector<4x256xf32>
    %c16_i32_9 = arith.constant 16 : i32
    %39 = vector.broadcast %c16_i32_9 : i32 to vector<1x256xi32>
    %40 = arith.cmpi sge, %11, %39 : vector<1x256xi32>
    %c272_i32_10 = arith.constant 272 : i32
    %41 = vector.broadcast %c272_i32_10 : i32 to vector<1x256xi32>
    %42 = arith.cmpi slt, %11, %41 : vector<1x256xi32>
    %43 = arith.andi %40, %42 : vector<1x256xi1>
    %c0_i32_11 = arith.constant 0 : i32
    %44 = vector.broadcast %c0_i32_11 : i32 to vector<1x256xi32>
    %45 = arith.addi %13, %44 : vector<1x256xi32>
    %c0_i32_12 = arith.constant 0 : i32
    %46 = vector.broadcast %c0_i32_12 : i32 to vector<1x256xi32>
    %47 = arith.cmpi sge, %45, %46 : vector<1x256xi32>
    %48 = arith.andi %43, %47 : vector<1x256xi1>
    %c0_i32_13 = arith.constant 0 : i32
    %49 = vector.broadcast %c0_i32_13 : i32 to vector<1x256xi32>
    %50 = arith.addi %13, %49 : vector<1x256xi32>
    %c16_i32_14 = arith.constant 16 : i32
    %51 = vector.broadcast %c16_i32_14 : i32 to vector<1x256xi32>
    %52 = arith.cmpi slt, %50, %51 : vector<1x256xi32>
    %53 = arith.andi %48, %52 : vector<1x256xi1>
    %cst_15 = arith.constant 0.000000e+00 : f32
    %54 = vector.shape_cast %53 : vector<1x256xi1> to vector<1x256xi1>
    %55 = vector.broadcast %54 : vector<1x256xi1> to vector<4x256xi1>
    %56 = vector.broadcast %cst_15 : f32 to vector<4x256xf32>
    %57 = arith.select %55, %38, %56 : vector<4x256xi1>, vector<4x256xf32>
    %58 = vector.extract_strided_slice %10 {offsets = [0, 241], sizes = [4, 15], strides = [1, 1]} : vector<4x256xf32> to vector<4x15xf32>
    %59 = vector.extract_strided_slice %10 {offsets = [0, 0], sizes = [4, 241], strides = [1, 1]} : vector<4x256xf32> to vector<4x241xf32>
    %60 = tpu.concatenate %58, %59 in 1 : vector<4x15xf32>, vector<4x241xf32> -> vector<4x256xf32>
    %c16_i32_16 = arith.constant 16 : i32
    %61 = vector.broadcast %c16_i32_16 : i32 to vector<1x256xi32>
    %62 = arith.cmpi sge, %11, %61 : vector<1x256xi32>
    %c272_i32_17 = arith.constant 272 : i32
    %63 = vector.broadcast %c272_i32_17 : i32 to vector<1x256xi32>
    %64 = arith.cmpi slt, %11, %63 : vector<1x256xi32>
    %65 = arith.andi %62, %64 : vector<1x256xi1>
    %c1_i32 = arith.constant 1 : i32
    %66 = vector.broadcast %c1_i32 : i32 to vector<1x256xi32>
    %67 = arith.addi %13, %66 : vector<1x256xi32>
    %c0_i32_18 = arith.constant 0 : i32
    %68 = vector.broadcast %c0_i32_18 : i32 to vector<1x256xi32>
    %69 = arith.cmpi sge, %67, %68 : vector<1x256xi32>
    %70 = arith.andi %65, %69 : vector<1x256xi1>
    %c1_i32_19 = arith.constant 1 : i32
    %71 = vector.broadcast %c1_i32_19 : i32 to vector<1x256xi32>
    %72 = arith.addi %13, %71 : vector<1x256xi32>
    %c16_i32_20 = arith.constant 16 : i32
    %73 = vector.broadcast %c16_i32_20 : i32 to vector<1x256xi32>
    %74 = arith.cmpi slt, %72, %73 : vector<1x256xi32>
    %75 = arith.andi %70, %74 : vector<1x256xi1>
    %cst_21 = arith.constant 0.000000e+00 : f32
    %76 = vector.shape_cast %75 : vector<1x256xi1> to vector<1x256xi1>
    %77 = vector.broadcast %76 : vector<1x256xi1> to vector<4x256xi1>
    %78 = vector.broadcast %cst_21 : f32 to vector<4x256xf32>
    %79 = arith.select %77, %60, %78 : vector<4x256xi1>, vector<4x256xf32>
    %80 = vector.extract_strided_slice %10 {offsets = [0, 255], sizes = [4, 1], strides = [1, 1]} : vector<4x256xf32> to vector<4x1xf32>
    %81 = vector.extract_strided_slice %10 {offsets = [0, 0], sizes = [4, 255], strides = [1, 1]} : vector<4x256xf32> to vector<4x255xf32>
    %82 = tpu.concatenate %80, %81 in 1 : vector<4x1xf32>, vector<4x255xf32> -> vector<4x256xf32>
    %c0_i32_22 = arith.constant 0 : i32
    %83 = vector.broadcast %c0_i32_22 : i32 to vector<1x256xi32>
    %84 = arith.cmpi sge, %11, %83 : vector<1x256xi32>
    %c256_i32 = arith.constant 256 : i32
    %85 = vector.broadcast %c256_i32 : i32 to vector<1x256xi32>
    %86 = arith.cmpi slt, %11, %85 : vector<1x256xi32>
    %87 = arith.andi %84, %86 : vector<1x256xi1>
    %c-1_i32_23 = arith.constant -1 : i32
    %88 = vector.broadcast %c-1_i32_23 : i32 to vector<1x256xi32>
    %89 = arith.addi %13, %88 : vector<1x256xi32>
    %c0_i32_24 = arith.constant 0 : i32
    %90 = vector.broadcast %c0_i32_24 : i32 to vector<1x256xi32>
    %91 = arith.cmpi sge, %89, %90 : vector<1x256xi32>
    %92 = arith.andi %87, %91 : vector<1x256xi1>
    %c-1_i32_25 = arith.constant -1 : i32
    %93 = vector.broadcast %c-1_i32_25 : i32 to vector<1x256xi32>
    %94 = arith.addi %13, %93 : vector<1x256xi32>
    %c16_i32_26 = arith.constant 16 : i32
    %95 = vector.broadcast %c16_i32_26 : i32 to vector<1x256xi32>
    %96 = arith.cmpi slt, %94, %95 : vector<1x256xi32>
    %97 = arith.andi %92, %96 : vector<1x256xi1>
    %cst_27 = arith.constant 0.000000e+00 : f32
    %98 = vector.shape_cast %97 : vector<1x256xi1> to vector<1x256xi1>
    %99 = vector.broadcast %98 : vector<1x256xi1> to vector<4x256xi1>
    %100 = vector.broadcast %cst_27 : f32 to vector<4x256xf32>
    %101 = arith.select %99, %82, %100 : vector<4x256xi1>, vector<4x256xf32>
    %102 = vector.extract_strided_slice %10 {offsets = [0, 1], sizes = [4, 255], strides = [1, 1]} : vector<4x256xf32> to vector<4x255xf32>
    %103 = vector.extract_strided_slice %10 {offsets = [0, 0], sizes = [4, 1], strides = [1, 1]} : vector<4x256xf32> to vector<4x1xf32>
    %104 = tpu.concatenate %102, %103 in 1 : vector<4x255xf32>, vector<4x1xf32> -> vector<4x256xf32>
    %c0_i32_28 = arith.constant 0 : i32
    %105 = vector.broadcast %c0_i32_28 : i32 to vector<1x256xi32>
    %106 = arith.cmpi sge, %11, %105 : vector<1x256xi32>
    %c256_i32_29 = arith.constant 256 : i32
    %107 = vector.broadcast %c256_i32_29 : i32 to vector<1x256xi32>
    %108 = arith.cmpi slt, %11, %107 : vector<1x256xi32>
    %109 = arith.andi %106, %108 : vector<1x256xi1>
    %c1_i32_30 = arith.constant 1 : i32
    %110 = vector.broadcast %c1_i32_30 : i32 to vector<1x256xi32>
    %111 = arith.addi %13, %110 : vector<1x256xi32>
    %c0_i32_31 = arith.constant 0 : i32
    %112 = vector.broadcast %c0_i32_31 : i32 to vector<1x256xi32>
    %113 = arith.cmpi sge, %111, %112 : vector<1x256xi32>
    %114 = arith.andi %109, %113 : vector<1x256xi1>
    %c1_i32_32 = arith.constant 1 : i32
    %115 = vector.broadcast %c1_i32_32 : i32 to vector<1x256xi32>
    %116 = arith.addi %13, %115 : vector<1x256xi32>
    %c16_i32_33 = arith.constant 16 : i32
    %117 = vector.broadcast %c16_i32_33 : i32 to vector<1x256xi32>
    %118 = arith.cmpi slt, %116, %117 : vector<1x256xi32>
    %119 = arith.andi %114, %118 : vector<1x256xi1>
    %cst_34 = arith.constant 0.000000e+00 : f32
    %120 = vector.shape_cast %119 : vector<1x256xi1> to vector<1x256xi1>
    %121 = vector.broadcast %120 : vector<1x256xi1> to vector<4x256xi1>
    %122 = vector.broadcast %cst_34 : f32 to vector<4x256xf32>
    %123 = arith.select %121, %104, %122 : vector<4x256xi1>, vector<4x256xf32>
    %124 = vector.extract_strided_slice %10 {offsets = [0, 15], sizes = [4, 241], strides = [1, 1]} : vector<4x256xf32> to vector<4x241xf32>
    %125 = vector.extract_strided_slice %10 {offsets = [0, 0], sizes = [4, 15], strides = [1, 1]} : vector<4x256xf32> to vector<4x15xf32>
    %126 = tpu.concatenate %124, %125 in 1 : vector<4x241xf32>, vector<4x15xf32> -> vector<4x256xf32>
    %c-16_i32 = arith.constant -16 : i32
    %127 = vector.broadcast %c-16_i32 : i32 to vector<1x256xi32>
    %128 = arith.cmpi sge, %11, %127 : vector<1x256xi32>
    %c240_i32 = arith.constant 240 : i32
    %129 = vector.broadcast %c240_i32 : i32 to vector<1x256xi32>
    %130 = arith.cmpi slt, %11, %129 : vector<1x256xi32>
    %131 = arith.andi %128, %130 : vector<1x256xi1>
    %c-1_i32_35 = arith.constant -1 : i32
    %132 = vector.broadcast %c-1_i32_35 : i32 to vector<1x256xi32>
    %133 = arith.addi %13, %132 : vector<1x256xi32>
    %c0_i32_36 = arith.constant 0 : i32
    %134 = vector.broadcast %c0_i32_36 : i32 to vector<1x256xi32>
    %135 = arith.cmpi sge, %133, %134 : vector<1x256xi32>
    %136 = arith.andi %131, %135 : vector<1x256xi1>
    %c-1_i32_37 = arith.constant -1 : i32
    %137 = vector.broadcast %c-1_i32_37 : i32 to vector<1x256xi32>
    %138 = arith.addi %13, %137 : vector<1x256xi32>
    %c16_i32_38 = arith.constant 16 : i32
    %139 = vector.broadcast %c16_i32_38 : i32 to vector<1x256xi32>
    %140 = arith.cmpi slt, %138, %139 : vector<1x256xi32>
    %141 = arith.andi %136, %140 : vector<1x256xi1>
    %cst_39 = arith.constant 0.000000e+00 : f32
    %142 = vector.shape_cast %141 : vector<1x256xi1> to vector<1x256xi1>
    %143 = vector.broadcast %142 : vector<1x256xi1> to vector<4x256xi1>
    %144 = vector.broadcast %cst_39 : f32 to vector<4x256xf32>
    %145 = arith.select %143, %126, %144 : vector<4x256xi1>, vector<4x256xf32>
    %146 = vector.extract_strided_slice %10 {offsets = [0, 16], sizes = [4, 240], strides = [1, 1]} : vector<4x256xf32> to vector<4x240xf32>
    %147 = vector.extract_strided_slice %10 {offsets = [0, 0], sizes = [4, 16], strides = [1, 1]} : vector<4x256xf32> to vector<4x16xf32>
    %148 = tpu.concatenate %146, %147 in 1 : vector<4x240xf32>, vector<4x16xf32> -> vector<4x256xf32>
    %c-16_i32_40 = arith.constant -16 : i32
    %149 = vector.broadcast %c-16_i32_40 : i32 to vector<1x256xi32>
    %150 = arith.cmpi sge, %11, %149 : vector<1x256xi32>
    %c240_i32_41 = arith.constant 240 : i32
    %151 = vector.broadcast %c240_i32_41 : i32 to vector<1x256xi32>
    %152 = arith.cmpi slt, %11, %151 : vector<1x256xi32>
    %153 = arith.andi %150, %152 : vector<1x256xi1>
    %c0_i32_42 = arith.constant 0 : i32
    %154 = vector.broadcast %c0_i32_42 : i32 to vector<1x256xi32>
    %155 = arith.addi %13, %154 : vector<1x256xi32>
    %c0_i32_43 = arith.constant 0 : i32
    %156 = vector.broadcast %c0_i32_43 : i32 to vector<1x256xi32>
    %157 = arith.cmpi sge, %155, %156 : vector<1x256xi32>
    %158 = arith.andi %153, %157 : vector<1x256xi1>
    %c0_i32_44 = arith.constant 0 : i32
    %159 = vector.broadcast %c0_i32_44 : i32 to vector<1x256xi32>
    %160 = arith.addi %13, %159 : vector<1x256xi32>
    %c16_i32_45 = arith.constant 16 : i32
    %161 = vector.broadcast %c16_i32_45 : i32 to vector<1x256xi32>
    %162 = arith.cmpi slt, %160, %161 : vector<1x256xi32>
    %163 = arith.andi %158, %162 : vector<1x256xi1>
    %cst_46 = arith.constant 0.000000e+00 : f32
    %164 = vector.shape_cast %163 : vector<1x256xi1> to vector<1x256xi1>
    %165 = vector.broadcast %164 : vector<1x256xi1> to vector<4x256xi1>
    %166 = vector.broadcast %cst_46 : f32 to vector<4x256xf32>
    %167 = arith.select %165, %148, %166 : vector<4x256xi1>, vector<4x256xf32>
    %168 = vector.extract_strided_slice %10 {offsets = [0, 17], sizes = [4, 239], strides = [1, 1]} : vector<4x256xf32> to vector<4x239xf32>
    %169 = vector.extract_strided_slice %10 {offsets = [0, 0], sizes = [4, 17], strides = [1, 1]} : vector<4x256xf32> to vector<4x17xf32>
    %170 = tpu.concatenate %168, %169 in 1 : vector<4x239xf32>, vector<4x17xf32> -> vector<4x256xf32>
    %c-16_i32_47 = arith.constant -16 : i32
    %171 = vector.broadcast %c-16_i32_47 : i32 to vector<1x256xi32>
    %172 = arith.cmpi sge, %11, %171 : vector<1x256xi32>
    %c240_i32_48 = arith.constant 240 : i32
    %173 = vector.broadcast %c240_i32_48 : i32 to vector<1x256xi32>
    %174 = arith.cmpi slt, %11, %173 : vector<1x256xi32>
    %175 = arith.andi %172, %174 : vector<1x256xi1>
    %c1_i32_49 = arith.constant 1 : i32
    %176 = vector.broadcast %c1_i32_49 : i32 to vector<1x256xi32>
    %177 = arith.addi %13, %176 : vector<1x256xi32>
    %c0_i32_50 = arith.constant 0 : i32
    %178 = vector.broadcast %c0_i32_50 : i32 to vector<1x256xi32>
    %179 = arith.cmpi sge, %177, %178 : vector<1x256xi32>
    %180 = arith.andi %175, %179 : vector<1x256xi1>
    %c1_i32_51 = arith.constant 1 : i32
    %181 = vector.broadcast %c1_i32_51 : i32 to vector<1x256xi32>
    %182 = arith.addi %13, %181 : vector<1x256xi32>
    %c16_i32_52 = arith.constant 16 : i32
    %183 = vector.broadcast %c16_i32_52 : i32 to vector<1x256xi32>
    %184 = arith.cmpi slt, %182, %183 : vector<1x256xi32>
    %185 = arith.andi %180, %184 : vector<1x256xi1>
    %cst_53 = arith.constant 0.000000e+00 : f32
    %186 = vector.shape_cast %185 : vector<1x256xi1> to vector<1x256xi1>
    %187 = vector.broadcast %186 : vector<1x256xi1> to vector<4x256xi1>
    %188 = vector.broadcast %cst_53 : f32 to vector<4x256xf32>
    %189 = arith.select %187, %170, %188 : vector<4x256xi1>, vector<4x256xf32>
    %190 = tpu.concatenate %35, %57, %79, %101, %10, %123, %145, %167, %189 in 0 : vector<4x256xf32>, vector<4x256xf32>, vector<4x256xf32>, vector<4x256xf32>, vector<4x256xf32>, vector<4x256xf32>, vector<4x256xf32>, vector<4x256xf32>, vector<4x256xf32> -> vector<36x256xf32>
    %191 = arith.truncf %190 : vector<36x256xf32> to vector<36x256xbf16>
    %c0_54 = arith.constant 0 : index
    %c0_55 = arith.constant 0 : index
    %192 = vector.load %arg4[%c0_54, %c0_55] : memref<4x36xbf16, #tpu.memory_space<vmem>>, vector<4x36xbf16>
    %cst_56 = arith.constant dense<0.000000e+00> : vector<4x256xf32>
    %193 = tpu.matmul %192, %191, %cst_56 {dimension_numbers = #tpu.dot_dimension_numbers<[1], [0], [0], [1], [0, 0, 1, 1], [], []>} : vector<4x36xbf16>, vector<36x256xbf16>, vector<4x256xf32> -> vector<4x256xf32>
    %cst_57 = arith.constant dense<0.000000e+00> : vector<4xf32>
    %194 = vector.multi_reduction <add>, %193, %cst_57 [1] : vector<4x256xf32> to vector<4xf32>
    %195 = vector.shape_cast %194 : vector<4xf32> to vector<4x1xf32>
    %c0_58 = arith.constant 0 : index
    %c0_59 = arith.constant 0 : index
    %c0_60 = arith.constant 0 : index
    %196 = vector.load %arg6[%c0_58, %c0_59, %c0_60] : memref<1x4x1xf32, #tpu.memory_space<vmem>>, vector<1x4x1xf32>
    %197 = vector.shape_cast %196 : vector<1x4x1xf32> to vector<4x1xf32>
    %198 = vector.shape_cast %195 : vector<4x1xf32> to vector<1x4x1xf32>
    tpu.vector_store %arg6[%c0_58, %c0_59, %c0_60], %198 {strides = array<i32>} : memref<1x4x1xf32, #tpu.memory_space<vmem>>, vector<1x4x1xf32>,
    %199 = arith.mulf %193, %193 : vector<4x256xf32>
    %cst_61 = arith.constant dense<0.000000e+00> : vector<4xf32>
    %200 = vector.multi_reduction <add>, %199, %cst_61 [1] : vector<4x256xf32> to vector<4xf32>
    %201 = vector.shape_cast %200 : vector<4xf32> to vector<4x1xf32>
    %c0_62 = arith.constant 0 : index
    %c0_63 = arith.constant 0 : index
    %c0_64 = arith.constant 0 : index
    %202 = vector.load %arg7[%c0_62, %c0_63, %c0_64] : memref<1x4x1xf32, #tpu.memory_space<vmem>>, vector<1x4x1xf32>
    %203 = vector.shape_cast %202 : vector<1x4x1xf32> to vector<4x1xf32>
    %204 = vector.shape_cast %201 : vector<4x1xf32> to vector<1x4x1xf32>
    tpu.vector_store %arg7[%c0_62, %c0_63, %c0_64], %204 {strides = array<i32>} : memref<1x4x1xf32, #tpu.memory_space<vmem>>, vector<1x4x1xf32>,
    %205 = arith.truncf %193 : vector<4x256xf32> to vector<4x256xbf16>
    %c0_65 = arith.constant 0 : index
    %c0_66 = arith.constant 0 : index
    %c0_67 = arith.constant 0 : index
    %206 = vector.load %arg5[%c0_65, %c0_66, %c0_67] : memref<1x4x256xbf16, #tpu.memory_space<vmem>>, vector<1x4x256xbf16>
    %207 = vector.shape_cast %206 : vector<1x4x256xbf16> to vector<4x256xbf16>
    %208 = vector.shape_cast %205 : vector<4x256xbf16> to vector<1x4x256xbf16>
    tpu.vector_store %arg5[%c0_65, %c0_66, %c0_67], %208 {strides = array<i32>} : memref<1x4x256xbf16, #tpu.memory_space<vmem>>, vector<1x4x256xbf16>,
    return
  }
  func.func @transform_0(%arg0: i32) -> (i32, i32, i32) {
    %c0_i32 = arith.constant 0 : i32
    %c0_i32_0 = arith.constant 0 : i32
    %c0_i32_1 = arith.constant 0 : i32
    return %arg0, %c0_i32, %c0_i32_0 : i32, i32, i32
  }
  func.func @transform_1(%arg0: i32) -> (i32, i32) {
    %c0_i32 = arith.constant 0 : i32
    %c0_i32_0 = arith.constant 0 : i32
    %c0_i32_1 = arith.constant 0 : i32
    return %c0_i32, %c0_i32_0 : i32, i32
  }
  func.func @transform_2(%arg0: i32) -> (i32, i32) {
    %c0_i32 = arith.constant 0 : i32
    %c0_i32_0 = arith.constant 0 : i32
    %c0_i32_1 = arith.constant 0 : i32
    return %c0_i32, %c0_i32_0 : i32, i32
  }
  func.func @transform_3(%arg0: i32) -> (i32, i32) {
    %c0_i32 = arith.constant 0 : i32
    %c0_i32_0 = arith.constant 0 : i32
    %c0_i32_1 = arith.constant 0 : i32
    return %c0_i32, %c0_i32_0 : i32, i32
  }
  func.func @transform_4(%arg0: i32) -> (i32, i32, i32) {
    %c0_i32 = arith.constant 0 : i32
    %c0_i32_0 = arith.constant 0 : i32
    %c0_i32_1 = arith.constant 0 : i32
    return %arg0, %c0_i32, %c0_i32_0 : i32, i32, i32
  }
  func.func @transform_5(%arg0: i32) -> (i32, i32, i32) {
    %c0_i32 = arith.constant 0 : i32
    %c0_i32_0 = arith.constant 0 : i32
    %c0_i32_1 = arith.constant 0 : i32
    return %arg0, %c0_i32, %c0_i32_0 : i32, i32, i32
  }
  func.func @transform_6(%arg0: i32) -> (i32, i32, i32) {
    %c0_i32 = arith.constant 0 : i32
    %c0_i32_0 = arith.constant 0 : i32
    %c0_i32_1 = arith.constant 0 : i32
    return %arg0, %c0_i32, %c0_i32_0 : i32, i32, i32
  }
}

module attributes {stable_mosaic.version = 11 : i64} {
  func.func @bn_residual_relu_kernel(%arg0: i32, %arg1: memref<1x4x256xbf16, #tpu.memory_space<vmem>>, %arg2: memref<1x4x256xf32, #tpu.memory_space<vmem>>, %arg3: memref<4x1xf32, #tpu.memory_space<vmem>>, %arg4: memref<4x1xf32, #tpu.memory_space<vmem>>, %arg5: memref<1x4x256xf32, #tpu.memory_space<vmem>>) attributes {dimension_semantics = [#tpu.dimension_semantics<parallel>], iteration_bounds = array<i64: 2>, scalar_prefetch = 0 : i64, scratch_operands = 0 : i64, tpu.core_type = #tpu.core_type<tc>, window_params = [{transform_indices = @transform_0, window_bounds = array<i64: 1, 4, 256>}, {transform_indices = @transform_1, window_bounds = array<i64: 1, 4, 256>}, {pipeline_mode = #tpu.pipeline_mode<synchronous>, transform_indices = @transform_2, window_bounds = array<i64: 4, 1>}, {pipeline_mode = #tpu.pipeline_mode<synchronous>, transform_indices = @transform_3, window_bounds = array<i64: 4, 1>}, {transform_indices = @transform_4, window_bounds = array<i64: 1, 4, 256>}]} {
    %c0 = arith.constant 0 : index
    %c0_0 = arith.constant 0 : index
    %c0_1 = arith.constant 0 : index
    %0 = vector.load %arg1[%c0, %c0_0, %c0_1] : memref<1x4x256xbf16, #tpu.memory_space<vmem>>, vector<1x4x256xbf16>
    %1 = vector.shape_cast %0 : vector<1x4x256xbf16> to vector<4x256xbf16>
    %2 = arith.extf %1 : vector<4x256xbf16> to vector<4x256xf32>
    %c0_2 = arith.constant 0 : index
    %c0_3 = arith.constant 0 : index
    %3 = vector.load %arg3[%c0_2, %c0_3] : memref<4x1xf32, #tpu.memory_space<vmem>>, vector<4x1xf32>
    %4 = vector.broadcast %3 : vector<4x1xf32> to vector<4x256xf32>
    %5 = arith.mulf %2, %4 : vector<4x256xf32>
    %c0_4 = arith.constant 0 : index
    %c0_5 = arith.constant 0 : index
    %6 = vector.load %arg4[%c0_4, %c0_5] : memref<4x1xf32, #tpu.memory_space<vmem>>, vector<4x1xf32>
    %7 = vector.broadcast %6 : vector<4x1xf32> to vector<4x256xf32>
    %8 = arith.addf %5, %7 : vector<4x256xf32>
    %c0_6 = arith.constant 0 : index
    %c0_7 = arith.constant 0 : index
    %c0_8 = arith.constant 0 : index
    %9 = vector.load %arg2[%c0_6, %c0_7, %c0_8] : memref<1x4x256xf32, #tpu.memory_space<vmem>>, vector<1x4x256xf32>
    %10 = vector.shape_cast %9 : vector<1x4x256xf32> to vector<4x256xf32>
    %11 = arith.addf %8, %10 : vector<4x256xf32>
    %cst = arith.constant 0.000000e+00 : f32
    %12 = vector.broadcast %cst : f32 to vector<4x256xf32>
    %13 = arith.maximumf %11, %12 : vector<4x256xf32>
    %c0_9 = arith.constant 0 : index
    %c0_10 = arith.constant 0 : index
    %c0_11 = arith.constant 0 : index
    %14 = vector.load %arg5[%c0_9, %c0_10, %c0_11] : memref<1x4x256xf32, #tpu.memory_space<vmem>>, vector<1x4x256xf32>
    %15 = vector.shape_cast %14 : vector<1x4x256xf32> to vector<4x256xf32>
    %16 = vector.shape_cast %13 : vector<4x256xf32> to vector<1x4x256xf32>
    tpu.vector_store %arg5[%c0_9, %c0_10, %c0_11], %16 {strides = array<i32>} : memref<1x4x256xf32, #tpu.memory_space<vmem>>, vector<1x4x256xf32>,
    return
  }
  func.func @transform_0(%arg0: i32) -> (i32, i32, i32) {
    %c0_i32 = arith.constant 0 : i32
    %c0_i32_0 = arith.constant 0 : i32
    %c0_i32_1 = arith.constant 0 : i32
    return %arg0, %c0_i32, %c0_i32_0 : i32, i32, i32
  }
  func.func @transform_1(%arg0: i32) -> (i32, i32, i32) {
    %c0_i32 = arith.constant 0 : i32
    %c0_i32_0 = arith.constant 0 : i32
    %c0_i32_1 = arith.constant 0 : i32
    return %arg0, %c0_i32, %c0_i32_0 : i32, i32, i32
  }
  func.func @transform_2(%arg0: i32) -> (i32, i32) {
    %c0_i32 = arith.constant 0 : i32
    %c0_i32_0 = arith.constant 0 : i32
    %c0_i32_1 = arith.constant 0 : i32
    return %c0_i32, %c0_i32_0 : i32, i32
  }
  func.func @transform_3(%arg0: i32) -> (i32, i32) {
    %c0_i32 = arith.constant 0 : i32
    %c0_i32_0 = arith.constant 0 : i32
    %c0_i32_1 = arith.constant 0 : i32
    return %c0_i32, %c0_i32_0 : i32, i32
  }
  func.func @transform_4(%arg0: i32) -> (i32, i32, i32) {
    %c0_i32 = arith.constant 0 : i32
    %c0_i32_0 = arith.constant 0 : i32
    %c0_i32_1 = arith.constant 0 : i32
    return %arg0, %c0_i32, %c0_i32_0 : i32, i32, i32
  }
}

</mosaic_0001>

<llo_original>
// kernel: res_block.5
$region0: #{res_block.5}
  #allocation0 [shape = 'u32[]', space=smem, size = 0x4, offset = 0x4, fixed_abs, tag = 'smem constant byte address 0x4 - core index']
  #allocation1 [shape = 'u32[144,128]{1,0:T(1,128)}', space=vmem, size = 0x12000, scoped, tag = 'internal scratch']
  %s0 = inlined_call_operand.vmem [shape: bf16[2,4,256], index: 0, kind: input, shape index: {}]
  %s1 = inlined_call_operand.vmem [shape: f32[2,4,256], index: 1, kind: input, shape index: {}]
  %s2 = inlined_call_operand.vmem [shape: f32[4,1], index: 2, kind: input, shape index: {}]
  %s3 = inlined_call_operand.vmem [shape: f32[4,1], index: 3, kind: input, shape index: {}]
  %s4 = inlined_call_operand.vmem [shape: f32[2,4,256], index: 4, kind: output, shape index: {}]
  %s5 = sld [smem:[#allocation0]]
  $region49: #{res_block.5} parent=0
    _
  %s7 = ssub.s32 1, %s5
  %s8 = scalar_select 0, %s7, %s5
  loop: start=0, step=1, limit=4
  $region2: #{res_block.5} parent=0 // loop_pre_header
    _
  $region3: #{res_block.5} parent=0 // loop_header
    %s10 = sphi 0, %s14
    %p11 = scmp.ge.s32.totalorder %s10, 4
    %s20 = sphi 0, %s22
    %s23 = sphi 0, %s20
    %s24 = sphi 0, %s23
    %s40 = sphi 0, %s24
    %s46 = sphi 0, %s48
    %s49 = sphi 0, %s46
    %s50 = sphi 0, %s49
    %s66 = sphi 0, %s50
    %s70 = sphi 0, %s70
    %s72 = sphi 0, %s70
    %s73 = sphi 0, %s72
    %s87 = sphi 0, %s73
    %s91 = sphi 0, %s91
    %s93 = sphi 0, %s91
    %s94 = sphi 0, %s93
    %s108 = sphi 0, %s94
    %s114 = sphi 0, %s116
    %s117 = sphi 0, %s114
    %s118 = sphi 0, %s117
    %s134 = sphi 0, %s118
  $region4: #{res_block.5} parent=0 // loop_header_branch
    %13 = sbr.rel (%p11) target = $region8
  $region5: #{res_block.5} parent=0 // loop_body
    %s15 = ssub.s32 %s10, 1
    %s16 = ssub.s32 %s10, 2
    %s17 = sadd.s32 %s10, 1
    %s18 = ssub.s32 %s10, %s17
    %p19 = scmp.eq.s32.totalorder %s18, 0
    %s21 = sadd.s32 %s20, 1
    %s22 = scalar_select %p19, %s20, %s21
    %p25 = pneg %p19
    %p26 = scmp.eq.s32.totalorder %s10, 1
    %p27 = por %p25, %p26
    %p28 = scmp.ne.s32.totalorder %s20, %s23
    %p29 = scmp.eq.s32.totalorder %s10, 0
    %p30 = por %p28, %p29
    %p31 = scmp.ne.s32.totalorder %s20, %s23
    %p32 = scmp.eq.s32.totalorder %s15, 1
    %p33 = por %p31, %p32
    %p34 = scmp.ne.s32.totalorder %s23, %s24
    %p35 = scmp.eq.s32.totalorder %s15, 0
    %p36 = por %p34, %p35
    %p37 = scmp.ne.s32.totalorder %s23, %s24
    %p38 = scmp.eq.s32.totalorder %s16, 1
    %p39 = por %p37, %p38
    %p41 = scmp.ne.s32.totalorder %s24, %s40
    %p42 = scmp.eq.s32.totalorder %s16, 0
    %p43 = por %p41, %p42
    %s44 = ssub.s32 %s10, %s17
    %p45 = scmp.eq.s32.totalorder %s44, 0
    %s47 = sadd.s32 %s46, 1
    %s48 = scalar_select %p45, %s46, %s47
    %p51 = pneg %p45
    %p52 = scmp.eq.s32.totalorder %s10, 1
    %p53 = por %p51, %p52
    %p54 = scmp.ne.s32.totalorder %s46, %s49
    %p55 = scmp.eq.s32.totalorder %s10, 0
    %p56 = por %p54, %p55
    %p57 = scmp.ne.s32.totalorder %s46, %s49
    %p58 = scmp.eq.s32.totalorder %s15, 1
    %p59 = por %p57, %p58
    %p60 = scmp.ne.s32.totalorder %s49, %s50
    %p61 = scmp.eq.s32.totalorder %s15, 0
    %p62 = por %p60, %p61
    %p63 = scmp.ne.s32.totalorder %s49, %s50
    %p64 = scmp.eq.s32.totalorder %s16, 1
    %p65 = por %p63, %p64
    %p67 = scmp.ne.s32.totalorder %s50, %s66
    %p68 = scmp.eq.s32.totalorder %s16, 0
    %p69 = por %p67, %p68
    %s71 = sadd.s32 %s70, 1
    %p74 = scmp.eq.s32.totalorder %s10, 1
    %p75 = scmp.ne.s32.totalorder %s70, %s72
    %p76 = scmp.eq.s32.totalorder %s10, 0
    %p77 = por %p75, %p76
    %p78 = scmp.ne.s32.totalorder %s70, %s72
    %p79 = scmp.eq.s32.totalorder %s15, 1
    %p80 = por %p78, %p79
    %p81 = scmp.ne.s32.totalorder %s72, %s73
    %p82 = scmp.eq.s32.totalorder %s15, 0
    %p83 = por %p81, %p82
    %p84 = scmp.ne.s32.totalorder %s72, %s73
    %p85 = scmp.eq.s32.totalorder %s16, 1
    %p86 = por %p84, %p85
    %p88 = scmp.ne.s32.totalorder %s73, %s87
    %p89 = scmp.eq.s32.totalorder %s16, 0
    %p90 = por %p88, %p89
    %s92 = sadd.s32 %s91, 1
    %p95 = scmp.eq.s32.totalorder %s10, 1
    %p96 = scmp.ne.s32.totalorder %s91, %s93
    %p97 = scmp.eq.s32.totalorder %s10, 0
    %p98 = por %p96, %p97
    %p99 = scmp.ne.s32.totalorder %s91, %s93
    %p100 = scmp.eq.s32.totalorder %s15, 1
    %p101 = por %p99, %p100
    %p102 = scmp.ne.s32.totalorder %s93, %s94
    %p103 = scmp.eq.s32.totalorder %s15, 0
    %p104 = por %p102, %p103
    %p105 = scmp.ne.s32.totalorder %s93, %s94
    %p106 = scmp.eq.s32.totalorder %s16, 1
    %p107 = por %p105, %p106
    %p109 = scmp.ne.s32.totalorder %s94, %s108
    %p110 = scmp.eq.s32.totalorder %s16, 0
    %p111 = por %p109, %p110
    %s112 = ssub.s32 %s10, %s17
    %p113 = scmp.eq.s32.totalorder %s112, 0
    %s115 = sadd.s32 %s114, 1
    %s116 = scalar_select %p113, %s114, %s115
    %p119 = pneg %p113
    %p120 = scmp.eq.s32.totalorder %s10, 1
    %p121 = por %p119, %p120
    %p122 = scmp.ne.s32.totalorder %s114, %s117
    %p123 = scmp.eq.s32.totalorder %s10, 0
    %p124 = por %p122, %p123
    %p125 = scmp.ne.s32.totalorder %s114, %s117
    %p126 = scmp.eq.s32.totalorder %s15, 1
    %p127 = por %p125, %p126
    %p128 = scmp.ne.s32.totalorder %s117, %s118
    %p129 = scmp.eq.s32.totalorder %s15, 0
    %p130 = por %p128, %p129
    %p131 = scmp.ne.s32.totalorder %s117, %s118
    %p132 = scmp.eq.s32.totalorder %s16, 1
    %p133 = por %p131, %p132
    %p135 = scmp.ne.s32.totalorder %s118, %s134
    %p136 = scmp.eq.s32.totalorder %s16, 0
    %p137 = por %p135, %p136
    %p138 = scmp.le.s32.totalorder 1, %s10
    %p139 = scmp.lt.s32.totalorder %s10, 3
    %p140 = pnand %p138, %p139
    %p141 = pneg %p140
    // Predicated region
    $region9: #{res_block.5} parent=5 // pred_check
      _
    $region10: #{res_block.5} parent=5 // pred_check_branch
      %143 = sbr.rel (%p140) target = $region12
    $region11: #{res_block.5} parent=5 // pred_region
      %s144 = ssub.s32 %s10, 1
      // Predicated region
      $region13: #{res_block.5} parent=11 // pred_check
        %p145 = pneg %p83
      $region14: #{res_block.5} parent=11 // pred_check_branch
        %147 = sbr.rel (%p145) target = $region16
      $region15: #{res_block.5} parent=11 // pred_region
        _
      $region16: #{res_block.5} parent=11 // pred_fallthru
        _
      // Predicated region
      $region17: #{res_block.5} parent=11 // pred_check
        %p148 = pneg %p104
      $region18: #{res_block.5} parent=11 // pred_check_branch
        %150 = sbr.rel (%p148) target = $region20
      $region19: #{res_block.5} parent=11 // pred_region
        _
      $region20: #{res_block.5} parent=11 // pred_fallthru
        _
    $region12: #{res_block.5} parent=5 // pred_fallthru
      _
    %p151 = scmp.lt.s32.totalorder %s10, 2
    // Predicated region
    $region21: #{res_block.5} parent=5 // pred_check
      %p152 = pneg %p151
    $region22: #{res_block.5} parent=5 // pred_check_branch
      %154 = sbr.rel (%p152) target = $region24
    $region23: #{res_block.5} parent=5 // pred_region
      // Predicated region
      $region25: #{res_block.5} parent=23 // pred_check
        %p155 = pneg %p30
      $region26: #{res_block.5} parent=23 // pred_check_branch
        %157 = sbr.rel (%p155) target = $region28
      $region27: #{res_block.5} parent=23 // pred_region
        %p158 = scmp.lt.s32.totalorder %s10, 1
        %s159 = scalar_select %p158, %s10, 1
        %s160 = smul.addr %s159, 2
        %s161 = smul.addr %s160, 2
        %s162 = scalar_lea.vmem %s0, %s161
      $region28: #{res_block.5} parent=23 // pred_fallthru
        _
      // Predicated region
      $region29: #{res_block.5} parent=23 // pred_check
        %p163 = pneg %p56
      $region30: #{res_block.5} parent=23 // pred_check_branch
        %165 = sbr.rel (%p163) target = $region32
      $region31: #{res_block.5} parent=23 // pred_region
        %p166 = scmp.lt.s32.totalorder %s10, 1
        %s167 = scalar_select %p166, %s10, 1
        %s168 = smul.addr %s167, 2
        %s169 = smul.addr %s168, 4
        %s170 = scalar_lea.vmem %s1, %s169
      $region32: #{res_block.5} parent=23 // pred_fallthru
        _
    $region24: #{res_block.5} parent=5 // pred_fallthru
      _
    %p171 = scmp.le.s32.totalorder 1, %s10
    %p172 = scmp.lt.s32.totalorder %s10, 3
    %p173 = pnand %p171, %p172
    %p174 = pneg %p173
    // Predicated region
    $region33: #{res_block.5} parent=5 // pred_check
      _
    $region34: #{res_block.5} parent=5 // pred_check_branch
      %176 = sbr.rel (%p173) target = $region36
    $region35: #{res_block.5} parent=5 // pred_region
      %s177 = ssub.s32 %s10, 1
      %p178 = scmp.lt.s32.totalorder %s15, 1
      %s179 = scalar_select %p178, %s15, 1
      %s180 = smul.addr %s179, 2
      %s181 = smul.addr %s180, 2
      %s182 = scalar_lea.vmem %s0, %s181
      %p183 = pneg %p36
      %p184 = pneg %p33
      %p185 = scmp.lt.s32.totalorder %s15, 1
      %s186 = scalar_select %p185, %s15, 1
      %s187 = smul.addr %s186, 2
      %s188 = smul.addr %s187, 4
      %s189 = scalar_lea.vmem %s1, %s188
      %p190 = pneg %p62
      %p191 = pneg %p59
      %p192 = pneg %p83
      %p193 = pneg %p80
      %p194 = pneg %p104
      %p195 = pneg %p101
      %p196 = pneg %p130
      %p197 = pneg %p127
      %p198 = scmp.lt.s32.totalorder %s15, 1
      %s199 = scalar_select %p198, %s15, 1
      %s200 = smul.addr %s199, 2
      %s201 = smul.addr %s200, 4
      %s202 = scalar_lea.vmem %s4, %s201
      %p203 = scmp.lt.s32.totalorder %s15, 1
      %s204 = scalar_select %p203, %s15, 1
      %s205 = smul.addr %s204, 2
      %s206 = smul.addr %s205, 2
      %s207 = scalar_lea.vmem %s0, %s206
      %p208 = scmp.lt.s32.totalorder %s15, 1
      %s209 = scalar_select %p208, %s15, 1
      %s210 = smul.addr %s209, 2
      %s211 = smul.addr %s210, 4
      %s212 = scalar_lea.vmem %s1, %s211
      %p213 = scmp.lt.s32.totalorder %s15, 1
      %s214 = scalar_select %p213, %s15, 1
      %s215 = smul.addr %s214, 2
      %s216 = smul.addr %s215, 4
      %s217 = scalar_lea.vmem %s4, %s216
      %v218 = vld [vmem:[%s207] sm:$0xf]
      %v219 = vunpack.c.l.bf16 %v218
      %v220 = vld [vmem:[%s2] sm:$0xf]
      %222 = vset.pattern.permute.xlu0 0
      %223 = vperm.xlu0 %222, %v220
      %v224 = vpop.permute.xlu0 %223
      %v226 = vunpack.c.l.s4 839922192
      %v227 = vunpack.c.0.s8 %v226
      %v228 = vlaneseq
      %v229 = vshrl.u32 %v228, 7
      %v230 = vsub.s32 %v227, %v229
      %v231 = vrot.slane %v224, %v230
      %v233 = vmul.f32 %v219, %v231
      %v234 = vld [vmem:[%s3] sm:$0xf]
      %236 = vset.pattern.permute.xlu0 0
      %237 = vperm.xlu0 %236, %v234
      %v238 = vpop.permute.xlu0 %237
      %v240 = vunpack.c.l.s4 839922192
      %v241 = vunpack.c.0.s8 %v240
      %v242 = vlaneseq
      %v243 = vshrl.u32 %v242, 7
      %v244 = vsub.s32 %v241, %v243
      %v245 = vrot.slane %v238, %v244
      %v247 = vadd.f32 %v233, %v245
      %v248 = vld [vmem:[%s212] sm:$0xff]
      %v249 = vadd.f32 %v247, %v248
      %v250 = vmax.f32 %v249, 0.0
      %251 = vst [vmem:[%s217] sm:$0xff] %v250
      %p252 = scmp.lt.s32.totalorder %s15, 1
      %s253 = scalar_select %p252, %s15, 1
      %s254 = smul.addr %s253, 2
      %s255 = smul.addr %s254, 4
      %s256 = scalar_lea.vmem %s4, %s255
      // Predicated region
      $region37: #{res_block.5} parent=35 // pred_check
        %p257 = pneg %p127
      $region38: #{res_block.5} parent=35 // pred_check_branch
        %259 = sbr.rel (%p257) target = $region40
      $region39: #{res_block.5} parent=35 // pred_region
        _
      $region40: #{res_block.5} parent=35 // pred_fallthru
        _
    $region36: #{res_block.5} parent=5 // pred_fallthru
      _
    %p260 = scmp.le.s32.totalorder 2, %s10
    // Predicated region
    $region41: #{res_block.5} parent=5 // pred_check
      %p261 = pneg %p260
    $region42: #{res_block.5} parent=5 // pred_check_branch
      %263 = sbr.rel (%p261) target = $region44
    $region43: #{res_block.5} parent=5 // pred_region
      %s264 = ssub.s32 %s10, 2
      // Predicated region
      $region45: #{res_block.5} parent=43 // pred_check
        %p265 = pneg %p133
      $region46: #{res_block.5} parent=43 // pred_check_branch
        %267 = sbr.rel (%p265) target = $region48
      $region47: #{res_block.5} parent=43 // pred_region
        %p268 = scmp.lt.s32.totalorder %s16, 1
        %s269 = scalar_select %p268, %s16, 1
        %s270 = smul.addr %s269, 2
        %s271 = smul.addr %s270, 4
        %s272 = scalar_lea.vmem %s4, %s271
      $region48: #{res_block.5} parent=43 // pred_fallthru
        _
    $region44: #{res_block.5} parent=5 // pred_fallthru
      _
  $region6: #{res_block.5} parent=0 // loop_footer
    %s14 = sadd.s32 1, %s10
  $region7: #{res_block.5} parent=0 // loop_footer_branch
    %9 = sbr.rel target = $region3
  $region8: #{res_block.5} parent=0 // loop_exit
    _

// kernel: res_block.4
$region0: #{res_block.4}
  #allocation0 [shape = 'u32[]', space=smem, size = 0x4, offset = 0x4, fixed_abs, tag = 'smem constant byte address 0x4 - core index']
  #allocation1 [shape = 'u32[144,128]{1,0:T(1,128)}', space=vmem, size = 0x12000, scoped, tag = 'internal scratch']
  %s0 = inlined_call_operand.vmem [shape: bf16[2,4,256], index: 0, kind: input, shape index: {}, may-alias: {0,4}]
  %s1 = inlined_call_operand.vmem [shape: f32[4,1], index: 1, kind: input, shape index: {}]
  %s2 = inlined_call_operand.vmem [shape: f32[4,1], index: 2, kind: input, shape index: {}]
  %s3 = inlined_call_operand.vmem [shape: bf16[4,36], index: 3, kind: input, shape index: {}]
  %s4 = inlined_call_operand.vmem [shape: bf16[2,4,256], index: 4, kind: output, shape index: {0}, may-alias: {0,4}]
  %s5 = inlined_call_operand.vmem [shape: f32[2,4,1], index: 5, kind: output, shape index: {1}]
  %s6 = inlined_call_operand.vmem [shape: f32[2,4,1], index: 6, kind: output, shape index: {2}]
  %7 = xla_tuple %s4, %s5, %s6
  %s8 = sld [smem:[#allocation0]]
  $region65: #{res_block.4} parent=0
    _
  %s10 = ssub.s32 1, %s8
  %s11 = scalar_select 0, %s10, %s8
  loop: start=0, step=1, limit=4
  $region2: #{res_block.4} parent=0 // loop_pre_header
    _
  $region3: #{res_block.4} parent=0 // loop_header
    %s13 = sphi 0, %s17
    %p14 = scmp.ge.s32.totalorder %s13, 4
    %s23 = sphi 0, %s25
    %s26 = sphi 0, %s23
    %s27 = sphi 0, %s26
    %s43 = sphi 0, %s27
    %s47 = sphi 0, %s47
    %s49 = sphi 0, %s47
    %s50 = sphi 0, %s49
    %s64 = sphi 0, %s50
    %s68 = sphi 0, %s68
    %s70 = sphi 0, %s68
    %s71 = sphi 0, %s70
    %s85 = sphi 0, %s71
    %s89 = sphi 0, %s89
    %s91 = sphi 0, %s89
    %s92 = sphi 0, %s91
    %s106 = sphi 0, %s92
    %s112 = sphi 0, %s114
    %s115 = sphi 0, %s112
    %s116 = sphi 0, %s115
    %s132 = sphi 0, %s116
    %s138 = sphi 0, %s140
    %s141 = sphi 0, %s138
    %s142 = sphi 0, %s141
    %s158 = sphi 0, %s142
    %s164 = sphi 0, %s166
    %s167 = sphi 0, %s164
    %s168 = sphi 0, %s167
    %s184 = sphi 0, %s168
  $region4: #{res_block.4} parent=0 // loop_header_branch
    %16 = sbr.rel (%p14) target = $region8
  $region5: #{res_block.4} parent=0 // loop_body
    %s18 = ssub.s32 %s13, 1
    %s19 = ssub.s32 %s13, 2
    %s20 = sadd.s32 %s13, 1
    %s21 = ssub.s32 %s13, %s20
    %p22 = scmp.eq.s32.totalorder %s21, 0
    %s24 = sadd.s32 %s23, 1
    %s25 = scalar_select %p22, %s23, %s24
    %p28 = pneg %p22
    %p29 = scmp.eq.s32.totalorder %s13, 1
    %p30 = por %p28, %p29
    %p31 = scmp.ne.s32.totalorder %s23, %s26
    %p32 = scmp.eq.s32.totalorder %s13, 0
    %p33 = por %p31, %p32
    %p34 = scmp.ne.s32.totalorder %s23, %s26
    %p35 = scmp.eq.s32.totalorder %s18, 1
    %p36 = por %p34, %p35
    %p37 = scmp.ne.s32.totalorder %s26, %s27
    %p38 = scmp.eq.s32.totalorder %s18, 0
    %p39 = por %p37, %p38
    %p40 = scmp.ne.s32.totalorder %s26, %s27
    %p41 = scmp.eq.s32.totalorder %s19, 1
    %p42 = por %p40, %p41
    %p44 = scmp.ne.s32.totalorder %s27, %s43
    %p45 = scmp.eq.s32.totalorder %s19, 0
    %p46 = por %p44, %p45
    %s48 = sadd.s32 %s47, 1
    %p51 = scmp.eq.s32.totalorder %s13, 1
    %p52 = scmp.ne.s32.totalorder %s47, %s49
    %p53 = scmp.eq.s32.totalorder %s13, 0
    %p54 = por %p52, %p53
    %p55 = scmp.ne.s32.totalorder %s47, %s49
    %p56 = scmp.eq.s32.totalorder %s18, 1
    %p57 = por %p55, %p56
    %p58 = scmp.ne.s32.totalorder %s49, %s50
    %p59 = scmp.eq.s32.totalorder %s18, 0
    %p60 = por %p58, %p59
    %p61 = scmp.ne.s32.totalorder %s49, %s50
    %p62 = scmp.eq.s32.totalorder %s19, 1
    %p63 = por %p61, %p62
    %p65 = scmp.ne.s32.totalorder %s50, %s64
    %p66 = scmp.eq.s32.totalorder %s19, 0
    %p67 = por %p65, %p66
    %s69 = sadd.s32 %s68, 1
    %p72 = scmp.eq.s32.totalorder %s13, 1
    %p73 = scmp.ne.s32.totalorder %s68, %s70
    %p74 = scmp.eq.s32.totalorder %s13, 0
    %p75 = por %p73, %p74
    %p76 = scmp.ne.s32.totalorder %s68, %s70
    %p77 = scmp.eq.s32.totalorder %s18, 1
    %p78 = por %p76, %p77
    %p79 = scmp.ne.s32.totalorder %s70, %s71
    %p80 = scmp.eq.s32.totalorder %s18, 0
    %p81 = por %p79, %p80
    %p82 = scmp.ne.s32.totalorder %s70, %s71
    %p83 = scmp.eq.s32.totalorder %s19, 1
    %p84 = por %p82, %p83
    %p86 = scmp.ne.s32.totalorder %s71, %s85
    %p87 = scmp.eq.s32.totalorder %s19, 0
    %p88 = por %p86, %p87
    %s90 = sadd.s32 %s89, 1
    %p93 = scmp.eq.s32.totalorder %s13, 1
    %p94 = scmp.ne.s32.totalorder %s89, %s91
    %p95 = scmp.eq.s32.totalorder %s13, 0
    %p96 = por %p94, %p95
    %p97 = scmp.ne.s32.totalorder %s89, %s91
    %p98 = scmp.eq.s32.totalorder %s18, 1
    %p99 = por %p97, %p98
    %p100 = scmp.ne.s32.totalorder %s91, %s92
    %p101 = scmp.eq.s32.totalorder %s18, 0
    %p102 = por %p100, %p101
    %p103 = scmp.ne.s32.totalorder %s91, %s92
    %p104 = scmp.eq.s32.totalorder %s19, 1
    %p105 = por %p103, %p104
    %p107 = scmp.ne.s32.totalorder %s92, %s106
    %p108 = scmp.eq.s32.totalorder %s19, 0
    %p109 = por %p107, %p108
    %s110 = ssub.s32 %s13, %s20
    %p111 = scmp.eq.s32.totalorder %s110, 0
    %s113 = sadd.s32 %s112, 1
    %s114 = scalar_select %p111, %s112, %s113
    %p117 = pneg %p111
    %p118 = scmp.eq.s32.totalorder %s13, 1
    %p119 = por %p117, %p118
    %p120 = scmp.ne.s32.totalorder %s112, %s115
    %p121 = scmp.eq.s32.totalorder %s13, 0
    %p122 = por %p120, %p121
    %p123 = scmp.ne.s32.totalorder %s112, %s115
    %p124 = scmp.eq.s32.totalorder %s18, 1
    %p125 = por %p123, %p124
    %p126 = scmp.ne.s32.totalorder %s115, %s116
    %p127 = scmp.eq.s32.totalorder %s18, 0
    %p128 = por %p126, %p127
    %p129 = scmp.ne.s32.totalorder %s115, %s116
    %p130 = scmp.eq.s32.totalorder %s19, 1
    %p131 = por %p129, %p130
    %p133 = scmp.ne.s32.totalorder %s116, %s132
    %p134 = scmp.eq.s32.totalorder %s19, 0
    %p135 = por %p133, %p134
    %s136 = ssub.s32 %s13, %s20
    %p137 = scmp.eq.s32.totalorder %s136, 0
    %s139 = sadd.s32 %s138, 1
    %s140 = scalar_select %p137, %s138, %s139
    %p143 = pneg %p137
    %p144 = scmp.eq.s32.totalorder %s13, 1
    %p145 = por %p143, %p144
    %p146 = scmp.ne.s32.totalorder %s138, %s141
    %p147 = scmp.eq.s32.totalorder %s13, 0
    %p148 = por %p146, %p147
    %p149 = scmp.ne.s32.totalorder %s138, %s141
    %p150 = scmp.eq.s32.totalorder %s18, 1
    %p151 = por %p149, %p150
    %p152 = scmp.ne.s32.totalorder %s141, %s142
    %p153 = scmp.eq.s32.totalorder %s18, 0
    %p154 = por %p152, %p153
    %p155 = scmp.ne.s32.totalorder %s141, %s142
    %p156 = scmp.eq.s32.totalorder %s19, 1
    %p157 = por %p155, %p156
    %p159 = scmp.ne.s32.totalorder %s142, %s158
    %p160 = scmp.eq.s32.totalorder %s19, 0
    %p161 = por %p159, %p160
    %s162 = ssub.s32 %s13, %s20
    %p163 = scmp.eq.s32.totalorder %s162, 0
    %s165 = sadd.s32 %s164, 1
    %s166 = scalar_select %p163, %s164, %s165
    %p169 = pneg %p163
    %p170 = scmp.eq.s32.totalorder %s13, 1
    %p171 = por %p169, %p170
    %p172 = scmp.ne.s32.totalorder %s164, %s167
    %p173 = scmp.eq.s32.totalorder %s13, 0
    %p174 = por %p172, %p173
    %p175 = scmp.ne.s32.totalorder %s164, %s167
    %p176 = scmp.eq.s32.totalorder %s18, 1
    %p177 = por %p175, %p176
    %p178 = scmp.ne.s32.totalorder %s167, %s168
    %p179 = scmp.eq.s32.totalorder %s18, 0
    %p180 = por %p178, %p179
    %p181 = scmp.ne.s32.totalorder %s167, %s168
    %p182 = scmp.eq.s32.totalorder %s19, 1
    %p183 = por %p181, %p182
    %p185 = scmp.ne.s32.totalorder %s168, %s184
    %p186 = scmp.eq.s32.totalorder %s19, 0
    %p187 = por %p185, %p186
    %p188 = scmp.le.s32.totalorder 1, %s13
    %p189 = scmp.lt.s32.totalorder %s13, 3
    %p190 = pnand %p188, %p189
    %p191 = pneg %p190
    // Predicated region
    $region9: #{res_block.4} parent=5 // pred_check
      _
    $region10: #{res_block.4} parent=5 // pred_check_branch
      %193 = sbr.rel (%p190) target = $region12
    $region11: #{res_block.4} parent=5 // pred_region
      %s194 = ssub.s32 %s13, 1
      // Predicated region
      $region13: #{res_block.4} parent=11 // pred_check
        %p195 = pneg %p60
      $region14: #{res_block.4} parent=11 // pred_check_branch
        %197 = sbr.rel (%p195) target = $region16
      $region15: #{res_block.4} parent=11 // pred_region
        _
      $region16: #{res_block.4} parent=11 // pred_fallthru
        _
      // Predicated region
      $region17: #{res_block.4} parent=11 // pred_check
        %p198 = pneg %p81
      $region18: #{res_block.4} parent=11 // pred_check_branch
        %200 = sbr.rel (%p198) target = $region20
      $region19: #{res_block.4} parent=11 // pred_region
        _
      $region20: #{res_block.4} parent=11 // pred_fallthru
        _
      // Predicated region
      $region21: #{res_block.4} parent=11 // pred_check
        %p201 = pneg %p102
      $region22: #{res_block.4} parent=11 // pred_check_branch
        %203 = sbr.rel (%p201) target = $region24
      $region23: #{res_block.4} parent=11 // pred_region
        _
      $region24: #{res_block.4} parent=11 // pred_fallthru
        _
    $region12: #{res_block.4} parent=5 // pred_fallthru
      _
    %p204 = scmp.lt.s32.totalorder %s13, 2
    // Predicated region
    $region25: #{res_block.4} parent=5 // pred_check
      %p205 = pneg %p204
    $region26: #{res_block.4} parent=5 // pred_check_branch
      %207 = sbr.rel (%p205) target = $region28
    $region27: #{res_block.4} parent=5 // pred_region
      // Predicated region
      $region29: #{res_block.4} parent=27 // pred_check
        %p208 = pneg %p33
      $region30: #{res_block.4} parent=27 // pred_check_branch
        %210 = sbr.rel (%p208) target = $region32
      $region31: #{res_block.4} parent=27 // pred_region
        %p211 = scmp.lt.s32.totalorder %s13, 1
        %s212 = scalar_select %p211, %s13, 1
        %s213 = smul.addr %s212, 2
        %s214 = smul.addr %s213, 2
        %s215 = scalar_lea.vmem %s0, %s214
      $region32: #{res_block.4} parent=27 // pred_fallthru
        _
    $region28: #{res_block.4} parent=5 // pred_fallthru
      _
    %p216 = scmp.le.s32.totalorder 1, %s13
    %p217 = scmp.lt.s32.totalorder %s13, 3
    %p218 = pnand %p216, %p217
    %p219 = pneg %p218
    // Predicated region
    $region33: #{res_block.4} parent=5 // pred_check
      _
    $region34: #{res_block.4} parent=5 // pred_check_branch
      %221 = sbr.rel (%p218) target = $region36
    $region35: #{res_block.4} parent=5 // pred_region
      %s222 = ssub.s32 %s13, 1
      %p223 = scmp.lt.s32.totalorder %s18, 1
      %s224 = scalar_select %p223, %s18, 1
      %s225 = smul.addr %s224, 2
      %s226 = smul.addr %s225, 2
      %s227 = scalar_lea.vmem %s0, %s226
      %p228 = pneg %p39
      %p229 = pneg %p36
      %p230 = pneg %p60
      %p231 = pneg %p57
      %p232 = pneg %p81
      %p233 = pneg %p78
      %p234 = pneg %p102
      %p235 = pneg %p99
      %p236 = pneg %p128
      %p237 = pneg %p125
      %p238 = scmp.lt.s32.totalorder %s18, 1
      %s239 = scalar_select %p238, %s18, 1
      %s240 = smul.addr %s239, 2
      %s241 = smul.addr %s240, 2
      %s242 = scalar_lea.vmem %s4, %s241
      %p243 = pneg %p154
      %p244 = pneg %p151
      %p245 = scmp.lt.s32.totalorder %s18, 1
      %s246 = scalar_select %p245, %s18, 1
      %s247 = smul.addr %s246, 4
      %s248 = scalar_lea.vmem %s5, %s247
      %p249 = pneg %p180
      %p250 = pneg %p177
      %p251 = scmp.lt.s32.totalorder %s18, 1
      %s252 = scalar_select %p251, %s18, 1
      %s253 = smul.addr %s252, 4
      %s254 = scalar_lea.vmem %s6, %s253
      %p255 = scmp.lt.s32.totalorder %s18, 1
      %s256 = scalar_select %p255, %s18, 1
      %s257 = smul.addr %s256, 2
      %s258 = smul.addr %s257, 2
      %s259 = scalar_lea.vmem %s0, %s258
      %p260 = scmp.lt.s32.totalorder %s18, 1
      %s261 = scalar_select %p260, %s18, 1
      %s262 = smul.addr %s261, 2
      %s263 = smul.addr %s262, 2
      %s264 = scalar_lea.vmem %s4, %s263
      %p265 = scmp.lt.s32.totalorder %s18, 1
      %s266 = scalar_select %p265, %s18, 1
      %s267 = smul.addr %s266, 4
      %s268 = scalar_lea.vmem %s5, %s267
      %p269 = scmp.lt.s32.totalorder %s18, 1
      %s270 = scalar_select %p269, %s18, 1
      %s271 = smul.addr %s270, 4
      %s272 = scalar_lea.vmem %s6, %s271
      %v274 = vld [vmem:[%s259] sm:$0xf]
      %v275 = vunpack.c.l.bf16 %v274
      %v276 = vld [vmem:[%s1] sm:$0xf]
      %278 = vset.pattern.permute.xlu0 0
      %279 = vperm.xlu0 %278, %v276
      %v280 = vpop.permute.xlu0 %279
      %v282 = vunpack.c.l.s4 839922192
      %v283 = vunpack.c.0.s8 %v282
      %v284 = vlaneseq
      %v285 = vshrl.u32 %v284, 7
      %v286 = vsub.s32 %v283, %v285
      %v287 = vrot.slane %v280, %v286
      %v289 = vmul.f32 %v275, %v287
      %v290 = vld [vmem:[%s2] sm:$0xf]
      %292 = vset.pattern.permute.xlu0 0
      %293 = vperm.xlu0 %292, %v290
      %v294 = vpop.permute.xlu0 %293
      %v296 = vunpack.c.l.s4 839922192
      %v297 = vunpack.c.0.s8 %v296
      %v298 = vlaneseq
      %v299 = vshrl.u32 %v298, 7
      %v300 = vsub.s32 %v297, %v299
      %v301 = vrot.slane %v294, %v300
      %v303 = vadd.f32 %v289, %v301
      %v304 = vmax.f32 %v303, 0.0
      %v305 = vlaneseq
      %v306 = vand.u32 %v305, 127
      %v307 = vadd.s32 %v306, 128
      %v308 = vand.u32 %v306, 15
      %v309 = vand.u32 %v307, 15
      %v311 = vcombine.high %v304, %v304
      %312 = vrot.lane.b32.xlu0 %v311, 17
      %v313 = vpop.permute.xlu0 %312
      %315 = vrot.lane.b32.xlu0 %v304, 17
      %v316 = vpop.permute.xlu0 %315
      %vm317 = vcmask 138240
      %v318 = vsel %vm317, %v316, %v313
      %v321 = vsel %vm317, %v313, %v316
      %vm322 = vcmp.ge.s32.totalorder %v306, 16
      %vm323 = vcmp.ge.s32.totalorder %v307, 16
      %vm324 = vcmp.lt.s32.totalorder %v306, 272
      %vm325 = vcmp.lt.s32.totalorder %v307, 272
      %vm326 = vmand %vm322, %vm324
      %vm327 = vmand %vm323, %vm325
      %v328 = vadd.s32 %v308, 4294967295
      %v329 = vadd.s32 %v309, 4294967295
      %vm330 = vcmp.ge.s32.totalorder %v328, 0
      %vm331 = vcmp.ge.s32.totalorder %v329, 0
      %vm332 = vmand %vm326, %vm330
      %vm333 = vmand %vm327, %vm331
      %vm334 = vcmp.lt.s32.totalorder %v328, 16
      %vm335 = vcmp.lt.s32.totalorder %v329, 16
      %vm336 = vmand %vm332, %vm334
      %vm337 = vmand %vm333, %vm335
      %v338 = vsel %vm336, 1, 0
      %v339 = vsel %vm337, 1, 0
      %vm340 = vcmp.eq.s32.totalorder %v338, 1
      %vm341 = vcmp.eq.s32.totalorder %v339, 1
      %v342 = vsel %vm340, %v321, 0.0
      %v343 = vsel %vm341, %v318, 0.0
      %344 = vrot.lane.b32.xlu0 %v311, 16
      %v345 = vpop.permute.xlu0 %344
      %347 = vrot.lane.b32.xlu0 %v304, 16
      %v348 = vpop.permute.xlu0 %347
      %vm349 = vcmask 130048
      %v350 = vsel %vm349, %v348, %v345
      %v353 = vsel %vm349, %v345, %v348
      %vm354 = vcmp.ge.s32.totalorder %v308, 0
      %vm355 = vcmp.ge.s32.totalorder %v309, 0
      %vm356 = vmand %vm326, %vm354
      %vm357 = vmand %vm327, %vm355
      %vm358 = vcmp.lt.s32.totalorder %v308, 16
      %vm359 = vcmp.lt.s32.totalorder %v309, 16
      %vm360 = vmand %vm356, %vm358
      %vm361 = vmand %vm357, %vm359
      %v362 = vsel %vm360, 1, 0
      %v363 = vsel %vm361, 1, 0
      %vm364 = vcmp.eq.s32.totalorder %v362, 1
      %vm365 = vcmp.eq.s32.totalorder %v363, 1
      %v366 = vsel %vm364, %v353, 0.0
      %v367 = vsel %vm365, %v350, 0.0
      %368 = vrot.lane.b32.xlu0 %v311, 15
      %v369 = vpop.permute.xlu0 %368
      %371 = vrot.lane.b32.xlu0 %v304, 15
      %v372 = vpop.permute.xlu0 %371
      %vm373 = vcmask 121856
      %v374 = vsel %vm373, %v372, %v369
      %v377 = vsel %vm373, %v369, %v372
      %v378 = vadd.s32 %v308, 1
      %v379 = vadd.s32 %v309, 1
      %vm380 = vcmp.ge.s32.totalorder %v378, 0
      %vm381 = vcmp.ge.s32.totalorder %v379, 0
      %vm382 = vmand %vm326, %vm380
      %vm383 = vmand %vm327, %vm381
      %vm384 = vcmp.lt.s32.totalorder %v378, 16
      %vm385 = vcmp.lt.s32.totalorder %v379, 16
      %vm386 = vmand %vm382, %vm384
      %vm387 = vmand %vm383, %vm385
      %v388 = vsel %vm386, 1, 0
      %v389 = vsel %vm387, 1, 0
      %vm390 = vcmp.eq.s32.totalorder %v388, 1
      %vm391 = vcmp.eq.s32.totalorder %v389, 1
      %v392 = vsel %vm390, %v377, 0.0
      %v393 = vsel %vm391, %v374, 0.0
      %394 = vrot.lane.b32.xlu0 %v311, 1
      %v395 = vpop.permute.xlu0 %394
      %397 = vrot.lane.b32.xlu0 %v304, 1
      %v398 = vpop.permute.xlu0 %397
      %vm399 = vcmask 7168
      %v400 = vsel %vm399, %v398, %v395
      %v403 = vsel %vm399, %v395, %v398
      %vm404 = vcmp.ge.s32.totalorder %v306, 0
      %vm405 = vcmp.ge.s32.totalorder %v307, 0
      %vm406 = vcmp.lt.s32.totalorder %v306, 256
      %vm407 = vcmp.lt.s32.totalorder %v307, 256
      %vm408 = vmand %vm404, %vm406
      %vm409 = vmand %vm405, %vm407
      %vm410 = vmand %vm408, %vm330
      %vm411 = vmand %vm409, %vm331
      %vm412 = vmand %vm410, %vm334
      %vm413 = vmand %vm411, %vm335
      %v414 = vsel %vm412, 1, 0
      %v415 = vsel %vm413, 1, 0
      %vm416 = vcmp.eq.s32.totalorder %v414, 1
      %vm417 = vcmp.eq.s32.totalorder %v415, 1
      %v418 = vsel %vm416, %v403, 0.0
      %v419 = vsel %vm417, %v400, 0.0
      %420 = vrot.lane.b32.xlu0 %v304, 127
      %v421 = vpop.permute.xlu0 %420
      %422 = vrot.lane.b32.xlu0 %v311, 127
      %v423 = vpop.permute.xlu0 %422
      %vm424 = vcmask 1039360
      %v425 = vsel %vm424, %v421, %v423
      %v429 = vsel %vm424, %v423, %v421
      %vm430 = vmand %vm408, %vm380
      %vm431 = vmand %vm409, %vm381
      %vm432 = vmand %vm430, %vm384
      %vm433 = vmand %vm431, %vm385
      %v434 = vsel %vm432, 1, 0
      %v435 = vsel %vm433, 1, 0
      %vm436 = vcmp.eq.s32.totalorder %v434, 1
      %vm437 = vcmp.eq.s32.totalorder %v435, 1
      %v438 = vsel %vm436, %v425, 0.0
      %v439 = vsel %vm437, %v429, 0.0
      %440 = vrot.lane.b32.xlu0 %v304, 113
      %v441 = vpop.permute.xlu0 %440
      %442 = vrot.lane.b32.xlu0 %v311, 113
      %v443 = vpop.permute.xlu0 %442
      %vm444 = vcmask 924672
      %v445 = vsel %vm444, %v441, %v443
      %v449 = vsel %vm444, %v443, %v441
      %vm450 = vcmp.ge.s32.totalorder %v306, 4294967280
      %vm451 = vcmp.ge.s32.totalorder %v307, 4294967280
      %vm452 = vcmp.lt.s32.totalorder %v306, 240
      %vm453 = vcmp.lt.s32.totalorder %v307, 240
      %vm454 = vmand %vm450, %vm452
      %vm455 = vmand %vm451, %vm453
      %vm456 = vmand %vm454, %vm330
      %vm457 = vmand %vm455, %vm331
      %vm458 = vmand %vm456, %vm334
      %vm459 = vmand %vm457, %vm335
      %v460 = vsel %vm458, 1, 0
      %v461 = vsel %vm459, 1, 0
      %vm462 = vcmp.eq.s32.totalorder %v460, 1
      %vm463 = vcmp.eq.s32.totalorder %v461, 1
      %v464 = vsel %vm462, %v445, 0.0
      %v465 = vsel %vm463, %v449, 0.0
      %466 = vrot.lane.b32.xlu0 %v304, 112
      %v467 = vpop.permute.xlu0 %466
      %468 = vrot.lane.b32.xlu0 %v311, 112
      %v469 = vpop.permute.xlu0 %468
      %vm470 = vcmask 916480
      %v471 = vsel %vm470, %v467, %v469
      %v475 = vsel %vm470, %v469, %v467
      %vm476 = vmand %vm454, %vm354
      %vm477 = vmand %vm455, %vm355
      %vm478 = vmand %vm476, %vm358
      %vm479 = vmand %vm477, %vm359
      %v480 = vsel %vm478, 1, 0
      %v481 = vsel %vm479, 1, 0
      %vm482 = vcmp.eq.s32.totalorder %v480, 1
      %vm483 = vcmp.eq.s32.totalorder %v481, 1
      %v484 = vsel %vm482, %v471, 0.0
      %v485 = vsel %vm483, %v475, 0.0
      %486 = vrot.lane.b32.xlu0 %v304, 111
      %v487 = vpop.permute.xlu0 %486
      %488 = vrot.lane.b32.xlu0 %v311, 111
      %v489 = vpop.permute.xlu0 %488
      %vm490 = vcmask 908288
      %v491 = vsel %vm490, %v487, %v489
      %v495 = vsel %vm490, %v489, %v487
      %vm496 = vmand %vm454, %vm380
      %vm497 = vmand %vm455, %vm381
      %vm498 = vmand %vm496, %vm384
      %vm499 = vmand %vm497, %vm385
      %v500 = vsel %vm498, 1, 0
      %v501 = vsel %vm499, 1, 0
      %vm502 = vcmp.eq.s32.totalorder %v500, 1
      %vm503 = vcmp.eq.s32.totalorder %v501, 1
      %v504 = vsel %vm502, %v491, 0.0
      %v505 = vsel %vm503, %v495, 0.0
      %v508 = vrot.slane %v366, 4
      %v509 = vrot.slane %v367, 4
      %v514 = vrot.slane %v418, 4
      %v515 = vrot.slane %v419, 4
      %v521 = vrot.slane %v438, 4
      %v522 = vrot.slane %v439, 4
      %v527 = vrot.slane %v484, 4
      %v528 = vrot.slane %v485, 4
      %vm531 = vcmask 1043456
      %v532 = vsel %vm531, %v342, %v508
      %v533 = vsel %vm531, %v343, %v509
      %v534 = vsel %vm531, %v392, %v514
      %v535 = vsel %vm531, %v393, %v515
      %v536 = vsel %vm531, %v304, %v521
      %v537 = vsel %vm531, %v311, %v522
      %v538 = vsel %vm531, %v464, %v527
      %v539 = vsel %vm531, %v465, %v528
      %v540 = vpack.c.bf16 %v534, %v532
      %v541 = vpack.c.bf16 %v535, %v533
      %v542 = vpack.c.bf16 %v538, %v536
      %v543 = vpack.c.bf16 %v539, %v537
      %v544 = vpack.c.bf16 %v504, %v504
      %v545 = vpack.c.bf16 %v505, %v505
      %v546 = vld [vmem:[%s3] sm:$0x3]
      %vm547 = vcmask 293888
      %v549 = vsel %vm547, %v546, 0
      %vm551 = vcmask 1041408
      %v553 = vsel %vm551, %v544, 0
      %v556 = vsel %vm551, %v545, 0
      %558 = vmatprep.subr.bf16.mxu0 %v541
      %559 = vmatpush1.bf16.msra.mxu0 %v540
      %560 = vmatprep.subr.bf16.mxu0 %v543
      %561 = vmatpush1.bf16.msra.mxu0 %v542
      %562 = vmatprep.subr.bf16.mxu0 %v556
      %563 = vmatpush1.bf16.msra.mxu0 %v553
      %564 = vmatprep.subr.bf16.mxu0 0
      %565 = vmatpush1.bf16.msra.mxu0 0
      %566 = vmatprep.subr.bf16.mxu0 0
      %567 = vmatpush1.bf16.msra.mxu0 0
      %568 = vmatprep.subr.bf16.mxu0 0
      %569 = vmatpush1.bf16.msra.mxu0 0
      %570 = vmatprep.subr.bf16.mxu0 0
      %571 = vmatpush1.bf16.msra.mxu0 0
      %572 = vmatprep.subr.bf16.mxu0 0
      %573 = vmatpush1.bf16.msra.mxu0 0
      %574 = vmatprep.subr.bf16.mxu0 0
      %575 = vmatpush1.bf16.msra.mxu0 0
      %576 = vmatprep.subr.bf16.mxu0 0
      %577 = vmatpush1.bf16.msra.mxu0 0
      %578 = vmatprep.subr.bf16.mxu0 0
      %579 = vmatpush1.bf16.msra.mxu0 0
      %580 = vmatprep.subr.bf16.mxu0 0
      %581 = vmatpush1.bf16.msra.mxu0 0
      %582 = vmatprep.subr.bf16.mxu0 0
      %583 = vmatpush1.bf16.msra.mxu0 0
      %584 = vmatprep.subr.bf16.mxu0 0
      %585 = vmatpush1.bf16.msra.mxu0 0
      %586 = vmatprep.subr.bf16.mxu0 0
      %587 = vmatpush1.bf16.msra.mxu0 0
      %588 = vmatprep.subr.bf16.mxu0 0
      %589 = vmatpush1.bf16.msra.mxu0 0
      %590 = vmatprep.mubr.bf16.mxu0 0
      %591 = vmatmul.mubr.bf16.gmra.mrb[0].mxu0 %v549
      %v592 = vpop.f32.mrb[0].mxu0
      %v593 = vadd.f32 0.0, %v592
      %v594 = vpop.f32.mrb[0].mxu0
      %v595 = vadd.f32 0.0, %v594
      %v596 = vpop.f32.mrb[0].mxu0
      %v597 = vpop.f32.mrb[0].mxu0
      %598 = vdwg.mxu0
      %v599 = vsel %vm531, %v593, 0.0
      %v600 = vsel %vm531, %v595, 0.0
      %v601 = vadd.f32 %v599, %v600
      %602 = vadd.xlane.f32.xlu0 %v601
      %v603 = vpop.xlane.xlu0 %602
      %vm604 = vcmask 3072
      %605 = vst.msk [vmem:[%s268] sm:$0xf] %vm604, %v603
      %v606 = vmul.f32 %v593, %v593
      %v607 = vmul.f32 %v595, %v595
      %v608 = vsel %vm531, %v606, 0.0
      %v609 = vsel %vm531, %v607, 0.0
      %v610 = vadd.f32 %v608, %v609
      %611 = vadd.xlane.f32.xlu0 %v610
      %v612 = vpop.xlane.xlu0 %611
      %613 = vst.msk [vmem:[%s272] sm:$0xf] %vm604, %v612
      %v614 = vpack.c.bf16 %v593, %v593
      %v615 = vpack.c.bf16 %v595, %v595
      %v618 = vcombine.low %v614, %v615
      %v620 = vunpack.c.l.s4 1983009808
      %v621 = vunpack.c.0.s8 %v620
      %v622 = vlaneseq
      %v623 = vshrl.u32 %v622, 7
      %v624 = vsub.s32 %v621, %v623
      %v625 = vrot.slane %v618, %v624
      %627 = vst [vmem:[%s264] sm:$0xf] %v625
      %p628 = scmp.lt.s32.totalorder %s18, 1
      %s629 = scalar_select %p628, %s18, 1
      %s630 = smul.addr %s629, 2
      %s631 = smul.addr %s630, 2
      %s632 = scalar_lea.vmem %s4, %s631
      %p633 = scmp.lt.s32.totalorder %s18, 1
      %s634 = scalar_select %p633, %s18, 1
      %s635 = smul.addr %s634, 4
      %s636 = scalar_lea.vmem %s5, %s635
      %p637 = scmp.lt.s32.totalorder %s18, 1
      %s638 = scalar_select %p637, %s18, 1
      %s639 = smul.addr %s638, 4
      %s640 = scalar_lea.vmem %s6, %s639
      // Predicated region
      $region37: #{res_block.4} parent=35 // pred_check
        %p641 = pneg %p125
      $region38: #{res_block.4} parent=35 // pred_check_branch
        %643 = sbr.rel (%p641) target = $region40
      $region39: #{res_block.4} parent=35 // pred_region
        _
      $region40: #{res_block.4} parent=35 // pred_fallthru
        _
      // Predicated region
      $region41: #{res_block.4} parent=35 // pred_check
        %p644 = pneg %p151
      $region42: #{res_block.4} parent=35 // pred_check_branch
        %646 = sbr.rel (%p644) target = $region44
      $region43: #{res_block.4} parent=35 // pred_region
        _
      $region44: #{res_block.4} parent=35 // pred_fallthru
        _
      // Predicated region
      $region45: #{res_block.4} parent=35 // pred_check
        %p647 = pneg %p177
      $region46: #{res_block.4} parent=35 // pred_check_branch
        %649 = sbr.rel (%p647) target = $region48
      $region47: #{res_block.4} parent=35 // pred_region
        _
      $region48: #{res_block.4} parent=35 // pred_fallthru
        _
    $region36: #{res_block.4} parent=5 // pred_fallthru
      _
    %p650 = scmp.le.s32.totalorder 2, %s13
    // Predicated region
    $region49: #{res_block.4} parent=5 // pred_check
      %p651 = pneg %p650
    $region50: #{res_block.4} parent=5 // pred_check_branch
      %653 = sbr.rel (%p651) target = $region52
    $region51: #{res_block.4} parent=5 // pred_region
      %s654 = ssub.s32 %s13, 2
      // Predicated region
      $region53: #{res_block.4} parent=51 // pred_check
        %p655 = pneg %p131
      $region54: #{res_block.4} parent=51 // pred_check_branch
        %657 = sbr.rel (%p655) target = $region56
      $region55: #{res_block.4} parent=51 // pred_region
        %p658 = scmp.lt.s32.totalorder %s19, 1
        %s659 = scalar_select %p658, %s19, 1
        %s660 = smul.addr %s659, 2
        %s661 = smul.addr %s660, 2
        %s662 = scalar_lea.vmem %s4, %s661
      $region56: #{res_block.4} parent=51 // pred_fallthru
        _
      // Predicated region
      $region57: #{res_block.4} parent=51 // pred_check
        %p663 = pneg %p157
      $region58: #{res_block.4} parent=51 // pred_check_branch
        %665 = sbr.rel (%p663) target = $region60
      $region59: #{res_block.4} parent=51 // pred_region
        %p666 = scmp.lt.s32.totalorder %s19, 1
        %s667 = scalar_select %p666, %s19, 1
        %s668 = smul.addr %s667, 4
        %s669 = scalar_lea.vmem %s5, %s668
      $region60: #{res_block.4} parent=51 // pred_fallthru
        _
      // Predicated region
      $region61: #{res_block.4} parent=51 // pred_check
        %p670 = pneg %p183
      $region62: #{res_block.4} parent=51 // pred_check_branch
        %672 = sbr.rel (%p670) target = $region64
      $region63: #{res_block.4} parent=51 // pred_region
        %p673 = scmp.lt.s32.totalorder %s19, 1
        %s674 = scalar_select %p673, %s19, 1
        %s675 = smul.addr %s674, 4
        %s676 = scalar_lea.vmem %s6, %s675
      $region64: #{res_block.4} parent=51 // pred_fallthru
        _
    $region52: #{res_block.4} parent=5 // pred_fallthru
      _
  $region6: #{res_block.4} parent=0 // loop_footer
    %s17 = sadd.s32 1, %s13
  $region7: #{res_block.4} parent=0 // loop_footer_branch
    %12 = sbr.rel target = $region3
  $region8: #{res_block.4} parent=0 // loop_exit
    _

// kernel: res_block.3
$region0: #{res_block.3}
  #allocation0 [shape = 'u32[]', space=smem, size = 0x4, offset = 0x4, fixed_abs, tag = 'smem constant byte address 0x4 - core index']
  #allocation1 [shape = 'u32[144,128]{1,0:T(1,128)}', space=vmem, size = 0x12000, scoped, tag = 'internal scratch']
  %s0 = inlined_call_operand.vmem [shape: f32[2,4,256], index: 0, kind: input, shape index: {}]
  %s1 = inlined_call_operand.vmem [shape: bf16[4,36], index: 1, kind: input, shape index: {}]
  %s2 = inlined_call_operand.vmem [shape: bf16[2,4,256], index: 2, kind: output, shape index: {0}]
  %s3 = inlined_call_operand.vmem [shape: f32[2,4,1], index: 3, kind: output, shape index: {1}]
  %s4 = inlined_call_operand.vmem [shape: f32[2,4,1], index: 4, kind: output, shape index: {2}]
  %5 = xla_tuple %s2, %s3, %s4
  %s6 = sld [smem:[#allocation0]]
  $region57: #{res_block.3} parent=0
    _
  %s8 = ssub.s32 1, %s6
  %s9 = scalar_select 0, %s8, %s6
  loop: start=0, step=1, limit=4
  $region2: #{res_block.3} parent=0 // loop_pre_header
    _
  $region3: #{res_block.3} parent=0 // loop_header
    %s11 = sphi 0, %s15
    %p12 = scmp.ge.s32.totalorder %s11, 4
    %s21 = sphi 0, %s23
    %s24 = sphi 0, %s21
    %s25 = sphi 0, %s24
    %s41 = sphi 0, %s25
    %s45 = sphi 0, %s45
    %s47 = sphi 0, %s45
    %s48 = sphi 0, %s47
    %s62 = sphi 0, %s48
    %s68 = sphi 0, %s70
    %s71 = sphi 0, %s68
    %s72 = sphi 0, %s71
    %s88 = sphi 0, %s72
    %s94 = sphi 0, %s96
    %s97 = sphi 0, %s94
    %s98 = sphi 0, %s97
    %s114 = sphi 0, %s98
    %s120 = sphi 0, %s122
    %s123 = sphi 0, %s120
    %s124 = sphi 0, %s123
    %s140 = sphi 0, %s124
  $region4: #{res_block.3} parent=0 // loop_header_branch
    %14 = sbr.rel (%p12) target = $region8
  $region5: #{res_block.3} parent=0 // loop_body
    %s16 = ssub.s32 %s11, 1
    %s17 = ssub.s32 %s11, 2
    %s18 = sadd.s32 %s11, 1
    %s19 = ssub.s32 %s11, %s18
    %p20 = scmp.eq.s32.totalorder %s19, 0
    %s22 = sadd.s32 %s21, 1
    %s23 = scalar_select %p20, %s21, %s22
    %p26 = pneg %p20
    %p27 = scmp.eq.s32.totalorder %s11, 1
    %p28 = por %p26, %p27
    %p29 = scmp.ne.s32.totalorder %s21, %s24
    %p30 = scmp.eq.s32.totalorder %s11, 0
    %p31 = por %p29, %p30
    %p32 = scmp.ne.s32.totalorder %s21, %s24
    %p33 = scmp.eq.s32.totalorder %s16, 1
    %p34 = por %p32, %p33
    %p35 = scmp.ne.s32.totalorder %s24, %s25
    %p36 = scmp.eq.s32.totalorder %s16, 0
    %p37 = por %p35, %p36
    %p38 = scmp.ne.s32.totalorder %s24, %s25
    %p39 = scmp.eq.s32.totalorder %s17, 1
    %p40 = por %p38, %p39
    %p42 = scmp.ne.s32.totalorder %s25, %s41
    %p43 = scmp.eq.s32.totalorder %s17, 0
    %p44 = por %p42, %p43
    %s46 = sadd.s32 %s45, 1
    %p49 = scmp.eq.s32.totalorder %s11, 1
    %p50 = scmp.ne.s32.totalorder %s45, %s47
    %p51 = scmp.eq.s32.totalorder %s11, 0
    %p52 = por %p50, %p51
    %p53 = scmp.ne.s32.totalorder %s45, %s47
    %p54 = scmp.eq.s32.totalorder %s16, 1
    %p55 = por %p53, %p54
    %p56 = scmp.ne.s32.totalorder %s47, %s48
    %p57 = scmp.eq.s32.totalorder %s16, 0
    %p58 = por %p56, %p57
    %p59 = scmp.ne.s32.totalorder %s47, %s48
    %p60 = scmp.eq.s32.totalorder %s17, 1
    %p61 = por %p59, %p60
    %p63 = scmp.ne.s32.totalorder %s48, %s62
    %p64 = scmp.eq.s32.totalorder %s17, 0
    %p65 = por %p63, %p64
    %s66 = ssub.s32 %s11, %s18
    %p67 = scmp.eq.s32.totalorder %s66, 0
    %s69 = sadd.s32 %s68, 1
    %s70 = scalar_select %p67, %s68, %s69
    %p73 = pneg %p67
    %p74 = scmp.eq.s32.totalorder %s11, 1
    %p75 = por %p73, %p74
    %p76 = scmp.ne.s32.totalorder %s68, %s71
    %p77 = scmp.eq.s32.totalorder %s11, 0
    %p78 = por %p76, %p77
    %p79 = scmp.ne.s32.totalorder %s68, %s71
    %p80 = scmp.eq.s32.totalorder %s16, 1
    %p81 = por %p79, %p80
    %p82 = scmp.ne.s32.totalorder %s71, %s72
    %p83 = scmp.eq.s32.totalorder %s16, 0
    %p84 = por %p82, %p83
    %p85 = scmp.ne.s32.totalorder %s71, %s72
    %p86 = scmp.eq.s32.totalorder %s17, 1
    %p87 = por %p85, %p86
    %p89 = scmp.ne.s32.totalorder %s72, %s88
    %p90 = scmp.eq.s32.totalorder %s17, 0
    %p91 = por %p89, %p90
    %s92 = ssub.s32 %s11, %s18
    %p93 = scmp.eq.s32.totalorder %s92, 0
    %s95 = sadd.s32 %s94, 1
    %s96 = scalar_select %p93, %s94, %s95
    %p99 = pneg %p93
    %p100 = scmp.eq.s32.totalorder %s11, 1
    %p101 = por %p99, %p100
    %p102 = scmp.ne.s32.totalorder %s94, %s97
    %p103 = scmp.eq.s32.totalorder %s11, 0
    %p104 = por %p102, %p103
    %p105 = scmp.ne.s32.totalorder %s94, %s97
    %p106 = scmp.eq.s32.totalorder %s16, 1
    %p107 = por %p105, %p106
    %p108 = scmp.ne.s32.totalorder %s97, %s98
    %p109 = scmp.eq.s32.totalorder %s16, 0
    %p110 = por %p108, %p109
    %p111 = scmp.ne.s32.totalorder %s97, %s98
    %p112 = scmp.eq.s32.totalorder %s17, 1
    %p113 = por %p111, %p112
    %p115 = scmp.ne.s32.totalorder %s98, %s114
    %p116 = scmp.eq.s32.totalorder %s17, 0
    %p117 = por %p115, %p116
    %s118 = ssub.s32 %s11, %s18
    %p119 = scmp.eq.s32.totalorder %s118, 0
    %s121 = sadd.s32 %s120, 1
    %s122 = scalar_select %p119, %s120, %s121
    %p125 = pneg %p119
    %p126 = scmp.eq.s32.totalorder %s11, 1
    %p127 = por %p125, %p126
    %p128 = scmp.ne.s32.totalorder %s120, %s123
    %p129 = scmp.eq.s32.totalorder %s11, 0
    %p130 = por %p128, %p129
    %p131 = scmp.ne.s32.totalorder %s120, %s123
    %p132 = scmp.eq.s32.totalorder %s16, 1
    %p133 = por %p131, %p132
    %p134 = scmp.ne.s32.totalorder %s123, %s124
    %p135 = scmp.eq.s32.totalorder %s16, 0
    %p136 = por %p134, %p135
    %p137 = scmp.ne.s32.totalorder %s123, %s124
    %p138 = scmp.eq.s32.totalorder %s17, 1
    %p139 = por %p137, %p138
    %p141 = scmp.ne.s32.totalorder %s124, %s140
    %p142 = scmp.eq.s32.totalorder %s17, 0
    %p143 = por %p141, %p142
    %p144 = scmp.le.s32.totalorder 1, %s11
    %p145 = scmp.lt.s32.totalorder %s11, 3
    %p146 = pnand %p144, %p145
    %p147 = pneg %p146
    // Predicated region
    $region9: #{res_block.3} parent=5 // pred_check
      _
    $region10: #{res_block.3} parent=5 // pred_check_branch
      %149 = sbr.rel (%p146) target = $region12
    $region11: #{res_block.3} parent=5 // pred_region
      %s150 = ssub.s32 %s11, 1
      // Predicated region
      $region13: #{res_block.3} parent=11 // pred_check
        %p151 = pneg %p58
      $region14: #{res_block.3} parent=11 // pred_check_branch
        %153 = sbr.rel (%p151) target = $region16
      $region15: #{res_block.3} parent=11 // pred_region
        _
      $region16: #{res_block.3} parent=11 // pred_fallthru
        _
    $region12: #{res_block.3} parent=5 // pred_fallthru
      _
    %p154 = scmp.lt.s32.totalorder %s11, 2
    // Predicated region
    $region17: #{res_block.3} parent=5 // pred_check
      %p155 = pneg %p154
    $region18: #{res_block.3} parent=5 // pred_check_branch
      %157 = sbr.rel (%p155) target = $region20
    $region19: #{res_block.3} parent=5 // pred_region
      // Predicated region
      $region21: #{res_block.3} parent=19 // pred_check
        %p158 = pneg %p31
      $region22: #{res_block.3} parent=19 // pred_check_branch
        %160 = sbr.rel (%p158) target = $region24
      $region23: #{res_block.3} parent=19 // pred_region
        %p161 = scmp.lt.s32.totalorder %s11, 1
        %s162 = scalar_select %p161, %s11, 1
        %s163 = smul.addr %s162, 2
        %s164 = smul.addr %s163, 4
        %s165 = scalar_lea.vmem %s0, %s164
      $region24: #{res_block.3} parent=19 // pred_fallthru
        _
    $region20: #{res_block.3} parent=5 // pred_fallthru
      _
    %p166 = scmp.le.s32.totalorder 1, %s11
    %p167 = scmp.lt.s32.totalorder %s11, 3
    %p168 = pnand %p166, %p167
    %p169 = pneg %p168
    // Predicated region
    $region25: #{res_block.3} parent=5 // pred_check
      _
    $region26: #{res_block.3} parent=5 // pred_check_branch
      %171 = sbr.rel (%p168) target = $region28
    $region27: #{res_block.3} parent=5 // pred_region
      %s172 = ssub.s32 %s11, 1
      %p173 = scmp.lt.s32.totalorder %s16, 1
      %s174 = scalar_select %p173, %s16, 1
      %s175 = smul.addr %s174, 2
      %s176 = smul.addr %s175, 4
      %s177 = scalar_lea.vmem %s0, %s176
      %p178 = pneg %p37
      %p179 = pneg %p34
      %p180 = pneg %p58
      %p181 = pneg %p55
      %p182 = pneg %p84
      %p183 = pneg %p81
      %p184 = scmp.lt.s32.totalorder %s16, 1
      %s185 = scalar_select %p184, %s16, 1
      %s186 = smul.addr %s185, 2
      %s187 = smul.addr %s186, 2
      %s188 = scalar_lea.vmem %s2, %s187
      %p189 = pneg %p110
      %p190 = pneg %p107
      %p191 = scmp.lt.s32.totalorder %s16, 1
      %s192 = scalar_select %p191, %s16, 1
      %s193 = smul.addr %s192, 4
      %s194 = scalar_lea.vmem %s3, %s193
      %p195 = pneg %p136
      %p196 = pneg %p133
      %p197 = scmp.lt.s32.totalorder %s16, 1
      %s198 = scalar_select %p197, %s16, 1
      %s199 = smul.addr %s198, 4
      %s200 = scalar_lea.vmem %s4, %s199
      %p201 = scmp.lt.s32.totalorder %s16, 1
      %s202 = scalar_select %p201, %s16, 1
      %s203 = smul.addr %s202, 2
      %s204 = smul.addr %s203, 4
      %s205 = scalar_lea.vmem %s0, %s204
      %p206 = scmp.lt.s32.totalorder %s16, 1
      %s207 = scalar_select %p206, %s16, 1
      %s208 = smul.addr %s207, 2
      %s209 = smul.addr %s208, 2
      %s210 = scalar_lea.vmem %s2, %s209
      %p211 = scmp.lt.s32.totalorder %s16, 1
      %s212 = scalar_select %p211, %s16, 1
      %s213 = smul.addr %s212, 4
      %s214 = scalar_lea.vmem %s3, %s213
      %p215 = scmp.lt.s32.totalorder %s16, 1
      %s216 = scalar_select %p215, %s16, 1
      %s217 = smul.addr %s216, 4
      %s218 = scalar_lea.vmem %s4, %s217
      %v220 = vld [vmem:[%s205] sm:$0xff]
      %v221 = vlaneseq
      %v222 = vand.u32 %v221, 127
      %v223 = vadd.s32 %v222, 128
      %v224 = vand.u32 %v222, 15
      %v225 = vand.u32 %v223, 15
      %v227 = vcombine.high %v220, %v220
      %228 = vrot.lane.b32.xlu0 %v227, 17
      %v229 = vpop.permute.xlu0 %228
      %231 = vrot.lane.b32.xlu0 %v220, 17
      %v232 = vpop.permute.xlu0 %231
      %vm233 = vcmask 138240
      %v234 = vsel %vm233, %v232, %v229
      %v237 = vsel %vm233, %v229, %v232
      %vm238 = vcmp.ge.s32.totalorder %v222, 16
      %vm239 = vcmp.ge.s32.totalorder %v223, 16
      %vm240 = vcmp.lt.s32.totalorder %v222, 272
      %vm241 = vcmp.lt.s32.totalorder %v223, 272
      %vm242 = vmand %vm238, %vm240
      %vm243 = vmand %vm239, %vm241
      %v244 = vadd.s32 %v224, 4294967295
      %v245 = vadd.s32 %v225, 4294967295
      %vm246 = vcmp.ge.s32.totalorder %v244, 0
      %vm247 = vcmp.ge.s32.totalorder %v245, 0
      %vm248 = vmand %vm242, %vm246
      %vm249 = vmand %vm243, %vm247
      %vm250 = vcmp.lt.s32.totalorder %v244, 16
      %vm251 = vcmp.lt.s32.totalorder %v245, 16
      %vm252 = vmand %vm248, %vm250
      %vm253 = vmand %vm249, %vm251
      %v254 = vsel %vm252, 1, 0
      %v255 = vsel %vm253, 1, 0
      %vm256 = vcmp.eq.s32.totalorder %v254, 1
      %vm257 = vcmp.eq.s32.totalorder %v255, 1
      %v258 = vsel %vm256, %v237, 0.0
      %v259 = vsel %vm257, %v234, 0.0
      %260 = vrot.lane.b32.xlu0 %v227, 16
      %v261 = vpop.permute.xlu0 %260
      %263 = vrot.lane.b32.xlu0 %v220, 16
      %v264 = vpop.permute.xlu0 %263
      %vm265 = vcmask 130048
      %v266 = vsel %vm265, %v264, %v261
      %v269 = vsel %vm265, %v261, %v264
      %vm270 = vcmp.ge.s32.totalorder %v224, 0
      %vm271 = vcmp.ge.s32.totalorder %v225, 0
      %vm272 = vmand %vm242, %vm270
      %vm273 = vmand %vm243, %vm271
      %vm274 = vcmp.lt.s32.totalorder %v224, 16
      %vm275 = vcmp.lt.s32.totalorder %v225, 16
      %vm276 = vmand %vm272, %vm274
      %vm277 = vmand %vm273, %vm275
      %v278 = vsel %vm276, 1, 0
      %v279 = vsel %vm277, 1, 0
      %vm280 = vcmp.eq.s32.totalorder %v278, 1
      %vm281 = vcmp.eq.s32.totalorder %v279, 1
      %v282 = vsel %vm280, %v269, 0.0
      %v283 = vsel %vm281, %v266, 0.0
      %284 = vrot.lane.b32.xlu0 %v227, 15
      %v285 = vpop.permute.xlu0 %284
      %287 = vrot.lane.b32.xlu0 %v220, 15
      %v288 = vpop.permute.xlu0 %287
      %vm289 = vcmask 121856
      %v290 = vsel %vm289, %v288, %v285
      %v293 = vsel %vm289, %v285, %v288
      %v294 = vadd.s32 %v224, 1
      %v295 = vadd.s32 %v225, 1
      %vm296 = vcmp.ge.s32.totalorder %v294, 0
      %vm297 = vcmp.ge.s32.totalorder %v295, 0
      %vm298 = vmand %vm242, %vm296
      %vm299 = vmand %vm243, %vm297
      %vm300 = vcmp.lt.s32.totalorder %v294, 16
      %vm301 = vcmp.lt.s32.totalorder %v295, 16
      %vm302 = vmand %vm298, %vm300
      %vm303 = vmand %vm299, %vm301
      %v304 = vsel %vm302, 1, 0
      %v305 = vsel %vm303, 1, 0
      %vm306 = vcmp.eq.s32.totalorder %v304, 1
      %vm307 = vcmp.eq.s32.totalorder %v305, 1
      %v308 = vsel %vm306, %v293, 0.0
      %v309 = vsel %vm307, %v290, 0.0
      %310 = vrot.lane.b32.xlu0 %v227, 1
      %v311 = vpop.permute.xlu0 %310
      %313 = vrot.lane.b32.xlu0 %v220, 1
      %v314 = vpop.permute.xlu0 %313
      %vm315 = vcmask 7168
      %v316 = vsel %vm315, %v314, %v311
      %v319 = vsel %vm315, %v311, %v314
      %vm320 = vcmp.ge.s32.totalorder %v222, 0
      %vm321 = vcmp.ge.s32.totalorder %v223, 0
      %vm322 = vcmp.lt.s32.totalorder %v222, 256
      %vm323 = vcmp.lt.s32.totalorder %v223, 256
      %vm324 = vmand %vm320, %vm322
      %vm325 = vmand %vm321, %vm323
      %vm326 = vmand %vm324, %vm246
      %vm327 = vmand %vm325, %vm247
      %vm328 = vmand %vm326, %vm250
      %vm329 = vmand %vm327, %vm251
      %v330 = vsel %vm328, 1, 0
      %v331 = vsel %vm329, 1, 0
      %vm332 = vcmp.eq.s32.totalorder %v330, 1
      %vm333 = vcmp.eq.s32.totalorder %v331, 1
      %v334 = vsel %vm332, %v319, 0.0
      %v335 = vsel %vm333, %v316, 0.0
      %336 = vrot.lane.b32.xlu0 %v220, 127
      %v337 = vpop.permute.xlu0 %336
      %338 = vrot.lane.b32.xlu0 %v227, 127
      %v339 = vpop.permute.xlu0 %338
      %vm340 = vcmask 1039360
      %v341 = vsel %vm340, %v337, %v339
      %v345 = vsel %vm340, %v339, %v337
      %vm346 = vmand %vm324, %vm296
      %vm347 = vmand %vm325, %vm297
      %vm348 = vmand %vm346, %vm300
      %vm349 = vmand %vm347, %vm301
      %v350 = vsel %vm348, 1, 0
      %v351 = vsel %vm349, 1, 0
      %vm352 = vcmp.eq.s32.totalorder %v350, 1
      %vm353 = vcmp.eq.s32.totalorder %v351, 1
      %v354 = vsel %vm352, %v341, 0.0
      %v355 = vsel %vm353, %v345, 0.0
      %356 = vrot.lane.b32.xlu0 %v220, 113
      %v357 = vpop.permute.xlu0 %356
      %358 = vrot.lane.b32.xlu0 %v227, 113
      %v359 = vpop.permute.xlu0 %358
      %vm360 = vcmask 924672
      %v361 = vsel %vm360, %v357, %v359
      %v365 = vsel %vm360, %v359, %v357
      %vm366 = vcmp.ge.s32.totalorder %v222, 4294967280
      %vm367 = vcmp.ge.s32.totalorder %v223, 4294967280
      %vm368 = vcmp.lt.s32.totalorder %v222, 240
      %vm369 = vcmp.lt.s32.totalorder %v223, 240
      %vm370 = vmand %vm366, %vm368
      %vm371 = vmand %vm367, %vm369
      %vm372 = vmand %vm370, %vm246
      %vm373 = vmand %vm371, %vm247
      %vm374 = vmand %vm372, %vm250
      %vm375 = vmand %vm373, %vm251
      %v376 = vsel %vm374, 1, 0
      %v377 = vsel %vm375, 1, 0
      %vm378 = vcmp.eq.s32.totalorder %v376, 1
      %vm379 = vcmp.eq.s32.totalorder %v377, 1
      %v380 = vsel %vm378, %v361, 0.0
      %v381 = vsel %vm379, %v365, 0.0
      %382 = vrot.lane.b32.xlu0 %v220, 112
      %v383 = vpop.permute.xlu0 %382
      %384 = vrot.lane.b32.xlu0 %v227, 112
      %v385 = vpop.permute.xlu0 %384
      %vm386 = vcmask 916480
      %v387 = vsel %vm386, %v383, %v385
      %v391 = vsel %vm386, %v385, %v383
      %vm392 = vmand %vm370, %vm270
      %vm393 = vmand %vm371, %vm271
      %vm394 = vmand %vm392, %vm274
      %vm395 = vmand %vm393, %vm275
      %v396 = vsel %vm394, 1, 0
      %v397 = vsel %vm395, 1, 0
      %vm398 = vcmp.eq.s32.totalorder %v396, 1
      %vm399 = vcmp.eq.s32.totalorder %v397, 1
      %v400 = vsel %vm398, %v387, 0.0
      %v401 = vsel %vm399, %v391, 0.0
      %402 = vrot.lane.b32.xlu0 %v220, 111
      %v403 = vpop.permute.xlu0 %402
      %404 = vrot.lane.b32.xlu0 %v227, 111
      %v405 = vpop.permute.xlu0 %404
      %vm406 = vcmask 908288
      %v407 = vsel %vm406, %v403, %v405
      %v411 = vsel %vm406, %v405, %v403
      %vm412 = vmand %vm370, %vm296
      %vm413 = vmand %vm371, %vm297
      %vm414 = vmand %vm412, %vm300
      %vm415 = vmand %vm413, %vm301
      %v416 = vsel %vm414, 1, 0
      %v417 = vsel %vm415, 1, 0
      %vm418 = vcmp.eq.s32.totalorder %v416, 1
      %vm419 = vcmp.eq.s32.totalorder %v417, 1
      %v420 = vsel %vm418, %v407, 0.0
      %v421 = vsel %vm419, %v411, 0.0
      %v424 = vrot.slane %v282, 4
      %v425 = vrot.slane %v283, 4
      %v430 = vrot.slane %v334, 4
      %v431 = vrot.slane %v335, 4
      %v437 = vrot.slane %v354, 4
      %v438 = vrot.slane %v355, 4
      %v443 = vrot.slane %v400, 4
      %v444 = vrot.slane %v401, 4
      %vm447 = vcmask 1043456
      %v448 = vsel %vm447, %v258, %v424
      %v449 = vsel %vm447, %v259, %v425
      %v450 = vsel %vm447, %v308, %v430
      %v451 = vsel %vm447, %v309, %v431
      %v452 = vsel %vm447, %v220, %v437
      %v453 = vsel %vm447, %v227, %v438
      %v454 = vsel %vm447, %v380, %v443
      %v455 = vsel %vm447, %v381, %v444
      %v456 = vpack.c.bf16 %v450, %v448
      %v457 = vpack.c.bf16 %v451, %v449
      %v458 = vpack.c.bf16 %v454, %v452
      %v459 = vpack.c.bf16 %v455, %v453
      %v460 = vpack.c.bf16 %v420, %v420
      %v461 = vpack.c.bf16 %v421, %v421
      %v462 = vld [vmem:[%s1] sm:$0x3]
      %vm463 = vcmask 293888
      %v465 = vsel %vm463, %v462, 0
      %vm467 = vcmask 1041408
      %v469 = vsel %vm467, %v460, 0
      %v472 = vsel %vm467, %v461, 0
      %474 = vmatprep.subr.bf16.mxu0 %v457
      %475 = vmatpush1.bf16.msra.mxu0 %v456
      %476 = vmatprep.subr.bf16.mxu0 %v459
      %477 = vmatpush1.bf16.msra.mxu0 %v458
      %478 = vmatprep.subr.bf16.mxu0 %v472
      %479 = vmatpush1.bf16.msra.mxu0 %v469
      %480 = vmatprep.subr.bf16.mxu0 0
      %481 = vmatpush1.bf16.msra.mxu0 0
      %482 = vmatprep.subr.bf16.mxu0 0
      %483 = vmatpush1.bf16.msra.mxu0 0
      %484 = vmatprep.subr.bf16.mxu0 0
      %485 = vmatpush1.bf16.msra.mxu0 0
      %486 = vmatprep.subr.bf16.mxu0 0
      %487 = vmatpush1.bf16.msra.mxu0 0
      %488 = vmatprep.subr.bf16.mxu0 0
      %489 = vmatpush1.bf16.msra.mxu0 0
      %490 = vmatprep.subr.bf16.mxu0 0
      %491 = vmatpush1.bf16.msra.mxu0 0
      %492 = vmatprep.subr.bf16.mxu0 0
      %493 = vmatpush1.bf16.msra.mxu0 0
      %494 = vmatprep.subr.bf16.mxu0 0
      %495 = vmatpush1.bf16.msra.mxu0 0
      %496 = vmatprep.subr.bf16.mxu0 0
      %497 = vmatpush1.bf16.msra.mxu0 0
      %498 = vmatprep.subr.bf16.mxu0 0
      %499 = vmatpush1.bf16.msra.mxu0 0
      %500 = vmatprep.subr.bf16.mxu0 0
      %501 = vmatpush1.bf16.msra.mxu0 0
      %502 = vmatprep.subr.bf16.mxu0 0
      %503 = vmatpush1.bf16.msra.mxu0 0
      %504 = vmatprep.subr.bf16.mxu0 0
      %505 = vmatpush1.bf16.msra.mxu0 0
      %506 = vmatprep.mubr.bf16.mxu0 0
      %507 = vmatmul.mubr.bf16.gmra.mrb[0].mxu0 %v465
      %v508 = vpop.f32.mrb[0].mxu0
      %v509 = vadd.f32 0.0, %v508
      %v510 = vpop.f32.mrb[0].mxu0
      %v511 = vadd.f32 0.0, %v510
      %v512 = vpop.f32.mrb[0].mxu0
      %v513 = vpop.f32.mrb[0].mxu0
      %514 = vdwg.mxu0
      %v515 = vsel %vm447, %v509, 0.0
      %v516 = vsel %vm447, %v511, 0.0
      %v517 = vadd.f32 %v515, %v516
      %518 = vadd.xlane.f32.xlu0 %v517
      %v519 = vpop.xlane.xlu0 %518
      %vm520 = vcmask 3072
      %521 = vst.msk [vmem:[%s214] sm:$0xf] %vm520, %v519
      %v522 = vmul.f32 %v509, %v509
      %v523 = vmul.f32 %v511, %v511
      %v524 = vsel %vm447, %v522, 0.0
      %v525 = vsel %vm447, %v523, 0.0
      %v526 = vadd.f32 %v524, %v525
      %527 = vadd.xlane.f32.xlu0 %v526
      %v528 = vpop.xlane.xlu0 %527
      %529 = vst.msk [vmem:[%s218] sm:$0xf] %vm520, %v528
      %v530 = vpack.c.bf16 %v509, %v509
      %v531 = vpack.c.bf16 %v511, %v511
      %v534 = vcombine.low %v530, %v531
      %v536 = vunpack.c.l.s4 1983009808
      %v537 = vunpack.c.0.s8 %v536
      %v538 = vlaneseq
      %v539 = vshrl.u32 %v538, 7
      %v540 = vsub.s32 %v537, %v539
      %v541 = vrot.slane %v534, %v540
      %543 = vst [vmem:[%s210] sm:$0xf] %v541
      %p544 = scmp.lt.s32.totalorder %s16, 1
      %s545 = scalar_select %p544, %s16, 1
      %s546 = smul.addr %s545, 2
      %s547 = smul.addr %s546, 2
      %s548 = scalar_lea.vmem %s2, %s547
      %p549 = scmp.lt.s32.totalorder %s16, 1
      %s550 = scalar_select %p549, %s16, 1
      %s551 = smul.addr %s550, 4
      %s552 = scalar_lea.vmem %s3, %s551
      %p553 = scmp.lt.s32.totalorder %s16, 1
      %s554 = scalar_select %p553, %s16, 1
      %s555 = smul.addr %s554, 4
      %s556 = scalar_lea.vmem %s4, %s555
      // Predicated region
      $region29: #{res_block.3} parent=27 // pred_check
        %p557 = pneg %p81
      $region30: #{res_block.3} parent=27 // pred_check_branch
        %559 = sbr.rel (%p557) target = $region32
      $region31: #{res_block.3} parent=27 // pred_region
        _
      $region32: #{res_block.3} parent=27 // pred_fallthru
        _
      // Predicated region
      $region33: #{res_block.3} parent=27 // pred_check
        %p560 = pneg %p107
      $region34: #{res_block.3} parent=27 // pred_check_branch
        %562 = sbr.rel (%p560) target = $region36
      $region35: #{res_block.3} parent=27 // pred_region
        _
      $region36: #{res_block.3} parent=27 // pred_fallthru
        _
      // Predicated region
      $region37: #{res_block.3} parent=27 // pred_check
        %p563 = pneg %p133
      $region38: #{res_block.3} parent=27 // pred_check_branch
        %565 = sbr.rel (%p563) target = $region40
      $region39: #{res_block.3} parent=27 // pred_region
        _
      $region40: #{res_block.3} parent=27 // pred_fallthru
        _
    $region28: #{res_block.3} parent=5 // pred_fallthru
      _
    %p566 = scmp.le.s32.totalorder 2, %s11
    // Predicated region
    $region41: #{res_block.3} parent=5 // pred_check
      %p567 = pneg %p566
    $region42: #{res_block.3} parent=5 // pred_check_branch
      %569 = sbr.rel (%p567) target = $region44
    $region43: #{res_block.3} parent=5 // pred_region
      %s570 = ssub.s32 %s11, 2
      // Predicated region
      $region45: #{res_block.3} parent=43 // pred_check
        %p571 = pneg %p87
      $region46: #{res_block.3} parent=43 // pred_check_branch
        %573 = sbr.rel (%p571) target = $region48
      $region47: #{res_block.3} parent=43 // pred_region
        %p574 = scmp.lt.s32.totalorder %s17, 1
        %s575 = scalar_select %p574, %s17, 1
        %s576 = smul.addr %s575, 2
        %s577 = smul.addr %s576, 2
        %s578 = scalar_lea.vmem %s2, %s577
      $region48: #{res_block.3} parent=43 // pred_fallthru
        _
      // Predicated region
      $region49: #{res_block.3} parent=43 // pred_check
        %p579 = pneg %p113
      $region50: #{res_block.3} parent=43 // pred_check_branch
        %581 = sbr.rel (%p579) target = $region52
      $region51: #{res_block.3} parent=43 // pred_region
        %p582 = scmp.lt.s32.totalorder %s17, 1
        %s583 = scalar_select %p582, %s17, 1
        %s584 = smul.addr %s583, 4
        %s585 = scalar_lea.vmem %s3, %s584
      $region52: #{res_block.3} parent=43 // pred_fallthru
        _
      // Predicated region
      $region53: #{res_block.3} parent=43 // pred_check
        %p586 = pneg %p139
      $region54: #{res_block.3} parent=43 // pred_check_branch
        %588 = sbr.rel (%p586) target = $region56
      $region55: #{res_block.3} parent=43 // pred_region
        %p589 = scmp.lt.s32.totalorder %s17, 1
        %s590 = scalar_select %p589, %s17, 1
        %s591 = smul.addr %s590, 4
        %s592 = scalar_lea.vmem %s4, %s591
      $region56: #{res_block.3} parent=43 // pred_fallthru
        _
    $region44: #{res_block.3} parent=5 // pred_fallthru
      _
  $region6: #{res_block.3} parent=0 // loop_footer
    %s15 = sadd.s32 1, %s11
  $region7: #{res_block.3} parent=0 // loop_footer_branch
    %10 = sbr.rel target = $region3
  $region8: #{res_block.3} parent=0 // loop_exit
    _

</llo_original>
